<compile_context>
chip_gen: v7x
topology: tpu7x:2x2x1
jax: 0.10.0
libtpu: 0.0.40
codegen_flags: <defaults>
</compile_context>

<pallas_src>
import numpy as np
import jax
import jax.numpy as jnp
from jax import lax
from jax.experimental import pallas as pl
from jax.experimental.pallas import tpu as pltpu


def _ceil_div(a, b):
    return -(-a // b)


def _make_welch_kernel(num_segments, nperseg, nstride, compute_dtype,
                       max_static_segments=16):
    """Kernel body for fixed segmenting geometry.

    Refs:
      x_ref  : (TB, stop)        raw f32 time rows (TB channels)
      wc_ref : (nperseg, ftile)  cos DFT matrix, window/scale/demean folded
      ws_ref : (nperseg, ftile)  sin DFT matrix, window/scale/demean folded
      out_ref: (TB, ftile)       accumulated one-sided PSD (1/S folded in)
    """
    use_offset = compute_dtype != jnp.float32  # bf16 conditioning only

    def kernel(x_ref, wc_ref, ws_ref, out_ref):
        # Hoist the RHS loads out of the segment loop (review item).
        wc = wc_ref[...]
        ws = ws_ref[...]

        # bf16 only: remove a per-row constant before the low-precision cast so
        # a large DC offset does not eat the bf16 mantissa.  The exact
        # per-segment demean is already folded into wc/ws, so this does not
        # change the math.
        if use_offset:
            off = jnp.mean(x_ref[:, pl.ds(0, nperseg)], axis=-1, keepdims=True)
        else:
            off = None

        def contrib(start):
            seg = x_ref[:, pl.ds(start, nperseg)]            # (TB, N) f32
            if off is not None:
                seg = seg - off
            seg = seg.astype(compute_dtype)
            yre = jnp.dot(seg, wc, preferred_element_type=jnp.float32)
            yim = jnp.dot(seg, ws, preferred_element_type=jnp.float32)
            return yre * yre + yim * yim                     # (TB, ftile) f32

        # Segment 0 stores directly -> skips the zero-init pass over out_ref.
        out_ref[...] = contrib(0)

        if num_segments <= max_static_segments:
            # Small segment counts: full static unroll, static slice starts.
            for s in range(1, num_segments):
                out_ref[...] += contrib(s * nstride)
        else:
            # Large counts: bounded unroll keeps code size / vreg pressure sane.
            align = nstride & -nstride                       # largest pow2 divisor

            def body(s, carry):
                start = s * nstride
                if align >= 8:
                    start = pl.multiple_of(start, align)
                out_ref[...] += contrib(start)
                return carry

            lax.fori_loop(1, num_segments, body, 0, unroll=4)

    return kernel


def welch_psd(x, sample_rate, fftlength, overlap=None, *,
              block_channels=256,        # 256 for v6e/v7x; use 128 on v5e
              ftile_target=1024,         # frequency-tile width target
              compute_dtype=jnp.bfloat16,
              max_static_segments=16):
    """Welch PSD matching TorchWelch.forward (average='mean', y=None).

    x: (..., T) float32 with up to 2 leading dims.  Returns (..., nfreq) f32.
    """
    if overlap is None:
        overlap = fftlength / 2
    nperseg = int(fftlength * sample_rate)
    nstride = nperseg - int(overlap * sample_rate)
    nfreq = nperseg // 2 + 1

    x = jnp.asarray(x, jnp.float32)
    if x.ndim > 3:
        raise ValueError(f"Can't perform welch transform on shape {x.shape}")
    lead_shape = x.shape[:-1]
    T = x.shape[-1]
    if T < nperseg:
        raise ValueError("input too short for nperseg")
    num_segments = (T - nperseg) // nstride + 1
    stop = (num_segments - 1) * nstride + nperseg

    BC = int(np.prod(lead_shape)) if lead_shape else 1
    xr = x.reshape(BC, T)[:, :stop]                          # (BC, stop)

    # ---- row (channel) blocking -------------------------------------------
    n_blocks = _ceil_div(BC, block_channels)
    if n_blocks == 1 and BC >= 16:
        # >=2 parallel row blocks lets the grid shard across v7x's 2 TensorCores.
        n_blocks = 2
    TB = _ceil_div(BC, n_blocks)
    if n_blocks > 1:
        TB = _ceil_div(TB, 8) * 8                            # sublane-aligned
    n_blocks = _ceil_div(BC, TB)
    BC_pad = n_blocks * TB
    if BC_pad != BC:
        xr = jnp.pad(xr, ((0, BC_pad - BC), (0, 0)))         # pad rows -> zeros

    # ---- frequency tiling (lane-dense, multiple of 128) --------------------
    fpad_min = _ceil_div(nfreq, 128) * 128
    if fpad_min <= ftile_target:
        ftile, n_ftiles = fpad_min, 1
    else:
        n_ftiles = _ceil_div(fpad_min, ftile_target)
        ftile = _ceil_div(_ceil_div(fpad_min, n_ftiles), 128) * 128
    fpad_total = n_ftiles * ftile

    # ---- host-side DFT matrices (torch.hann_window, periodic) --------------
    n = np.arange(nperseg, dtype=np.float64)
    window = 0.5 * (1.0 - np.cos(2.0 * np.pi * n / nperseg))
    scale = 1.0 / (sample_rate * np.sum(window ** 2))
    freqs = np.arange(nfreq, dtype=np.float64)
    ang = 2.0 * np.pi * np.outer(n, freqs) / nperseg
    doubling = np.full((nfreq,), 2.0)                        # one-sided doubling
    doubling[0] = 1.0
    if nperseg % 2 == 0:
        doubling[-1] = 1.0
    # Fold window, doubling, PSD scale and 1/num_segments (final mean) in as
    # sqrt factors -> kernel is pure matmul + square + accumulate.
    col_scale = np.sqrt(doubling * scale / num_segments)
    cos_w = window[:, None] * np.cos(ang) * col_scale[None, :]
    sin_w = window[:, None] * (-np.sin(ang)) * col_scale[None, :]
    # Fold the per-segment demean EXACTLY into the matrices:
    #   (seg - mean(seg)) @ W == seg @ (W - colmean(W))
    cos_w -= cos_w.mean(axis=0, keepdims=True)
    sin_w -= sin_w.mean(axis=0, keepdims=True)

    wc = np.zeros((nperseg, fpad_total), dtype=np.float64)
    ws = np.zeros((nperseg, fpad_total), dtype=np.float64)
    wc[:, :nfreq] = cos_w
    ws[:, :nfreq] = sin_w
    wc = jnp.asarray(wc, dtype=compute_dtype)                # pad cols stay exact 0
    ws = jnp.asarray(ws, dtype=compute_dtype)

    # ---- VMEM budget / compiler params --------------------------------------
    w_itemsize = jnp.dtype(compute_dtype).itemsize
    x_block_bytes = TB * stop * 4
    w_block_bytes = nperseg * ftile * w_itemsize
    out_block_bytes = TB * ftile * 4
    scratch_bytes = TB * nperseg * (4 + w_itemsize) + 4 * TB * ftile * 4
    needed = (2 * x_block_bytes + 2 * 2 * w_block_bytes
              + 2 * out_block_bytes + scratch_bytes)
    # Explicit scoped-VMEM limit (default is 16 MiB on v5e / 32 MiB elsewhere);
    # cap below v5e/v6e's 128 MiB physical.  Note v7x has only 64 MiB per TC.
    vmem_limit = int(max(32 << 20, min(100 << 20, needed + (8 << 20))))

    # W index map is constant across the grid when n_ftiles == 1; single-buffer
    # it (only worth the bother when the block is large).
    w_spec_kwargs = {}
    if n_ftiles == 1 and w_block_bytes > (4 << 20):
        w_spec_kwargs = dict(pipeline_mode=pl.Buffered(1))
    wc_spec = pl.BlockSpec((nperseg, ftile), lambda i, j: (0, j), **w_spec_kwargs)
    ws_spec = pl.BlockSpec((nperseg, ftile), lambda i, j: (0, j), **w_spec_kwargs)

    kernel = _make_welch_kernel(num_segments, nperseg, nstride, compute_dtype,
                                max_static_segments)

    flops = 4 * BC_pad * num_segments * nperseg * fpad_total
    bytes_accessed = (BC_pad * stop * 4
                      + 2 * nperseg * fpad_total * w_itemsize
                      + BC_pad * fpad_total * 4)

    out = pl.pallas_call(
        kernel,
        out_shape=jax.ShapeDtypeStruct((BC_pad, fpad_total), jnp.float32),
        grid_spec=pltpu.PrefetchScalarGridSpec(
            num_scalar_prefetch=0,
            # ftile axis innermost so the (TB, stop) x block is fetched once
            # per row block and W cycles underneath it.
            grid=(n_blocks, n_ftiles),
            in_specs=[
                pl.BlockSpec((TB, stop), lambda i, j: (i, 0)),
                wc_spec,
                ws_spec,
            ],
            out_specs=pl.BlockSpec((TB, ftile), lambda i, j: (i, j)),
        ),
        compiler_params=pltpu.CompilerParams(
            dimension_semantics=("parallel", "parallel"),
            vmem_limit_bytes=vmem_limit),
        cost_estimate=pl.CostEstimate(flops=int(flops), transcendentals=0,
                                      bytes_accessed=int(bytes_accessed)),
    )(xr, wc, ws)

    out = out[:BC, :nfreq]
    return out.reshape(lead_shape + (nfreq,))


def welch_psd_ref(x, sample_rate, fftlength, overlap=None):
    """Pure-JAX reference mirroring TorchWelch.forward (mean average, y=None)."""
    if overlap is None:
        overlap = fftlength / 2
    nperseg = int(fftlength * sample_rate)
    nstride = nperseg - int(overlap * sample_rate)
    B, C, T = x.shape
    num_segments = (T - nperseg) // nstride + 1
    stop = (num_segments - 1) * nstride + nperseg
    x = x[..., :stop].reshape(B * C, stop)
    starts = np.arange(num_segments) * nstride
    idx = starts[:, None] + np.arange(nperseg)[None, :]
    segs = x[:, idx]                                                 # (BC, S, N)
    segs = segs - jnp.mean(segs, axis=-1, keepdims=True)
    n = jnp.arange(nperseg)
    window = 0.5 * (1.0 - jnp.cos(2.0 * jnp.pi * n / nperseg))
    scale = 1.0 / (sample_rate * jnp.sum(window ** 2))
    segs = segs * window
    fft = jnp.abs(jnp.fft.rfft(segs, axis=-1)) ** 2
    if nperseg % 2:
        fft = fft.at[..., 1:].multiply(2.0)
    else:
        fft = fft.at[..., 1:-1].multiply(2.0)
    fft = fft * scale
    return jnp.mean(fft, axis=1).reshape(B, C, -1)


if __name__ == "__main__":
    sample_rate = 32.0
    fftlength = 4.0            # nperseg = 128
    overlap = 2.0              # nstride = 64
    B, C = 2, 4
    T = 128 + 64 * 7           # -> 8 segments

    key = jax.random.PRNGKey(0)
    x = jax.random.normal(key, (B, C, T), dtype=jnp.float32)

    ref = jax.block_until_ready(welch_psd_ref(x, sample_rate, fftlength, overlap))

    # f32 compute path: tight match against the rfft reference.
    psd_f32 = jax.block_until_ready(
        welch_psd(x, sample_rate, fftlength, overlap, compute_dtype=jnp.float32))
    np.testing.assert_allclose(np.asarray(psd_f32), np.asarray(ref),
                               rtol=1e-4, atol=1e-6)

    # Default bf16 MXU path (single-pass rate): looser tolerance, as flagged
    # in the performance review.
    psd_bf16 = jax.block_until_ready(welch_psd(x, sample_rate, fftlength, overlap))
    np.testing.assert_allclose(np.asarray(psd_bf16), np.asarray(ref),
                               rtol=5e-2, atol=2e-3)

    print("KERNEL_OK")
</pallas_src>

<mosaic_0001>
module attributes {stable_mosaic.version = 11 : i64} {
  func.func @kernel(%arg0: i32, %arg1: i32, %arg2: memref<8x576xf32, #tpu.memory_space<vmem>>, %arg3: memref<128x128xf32, #tpu.memory_space<vmem>>, %arg4: memref<128x128xf32, #tpu.memory_space<vmem>>, %arg5: memref<8x128xf32, #tpu.memory_space<vmem>>) attributes {dimension_semantics = [#tpu.dimension_semantics<parallel>, #tpu.dimension_semantics<parallel>], iteration_bounds = array<i64: 1, 1>, scalar_prefetch = 0 : i64, scratch_operands = 0 : i64, tpu.core_type = #tpu.core_type<tc>, window_params = [{transform_indices = @transform_0, window_bounds = array<i64: 8, 576>}, {transform_indices = @transform_1, window_bounds = array<i64: 128, 128>}, {transform_indices = @transform_2, window_bounds = array<i64: 128, 128>}, {transform_indices = @transform_3, window_bounds = array<i64: 8, 128>}]} {
    %c0 = arith.constant 0 : index
    %c0_0 = arith.constant 0 : index
    %0 = vector.load %arg3[%c0, %c0_0] : memref<128x128xf32, #tpu.memory_space<vmem>>, vector<128x128xf32>
    %c0_1 = arith.constant 0 : index
    %c0_2 = arith.constant 0 : index
    %1 = vector.load %arg4[%c0_1, %c0_2] : memref<128x128xf32, #tpu.memory_space<vmem>>, vector<128x128xf32>
    %c0_3 = arith.constant 0 : index
    %c0_4 = arith.constant 0 : index
    %2 = vector.load %arg2[%c0_3, %c0_4] : memref<8x576xf32, #tpu.memory_space<vmem>>, vector<8x128xf32>
    %cst = arith.constant dense<0.000000e+00> : vector<8x128xf32>
    %3 = tpu.matmul %2, %0, %cst {dimension_numbers = #tpu.dot_dimension_numbers<[1], [0], [0], [1], [0, 0, 1, 1], [], []>} : vector<8x128xf32>, vector<128x128xf32>, vector<8x128xf32> -> vector<8x128xf32>
    %cst_5 = arith.constant dense<0.000000e+00> : vector<8x128xf32>
    %4 = tpu.matmul %2, %1, %cst_5 {dimension_numbers = #tpu.dot_dimension_numbers<[1], [0], [0], [1], [0, 0, 1, 1], [], []>} : vector<8x128xf32>, vector<128x128xf32>, vector<8x128xf32> -> vector<8x128xf32>
    %5 = arith.mulf %3, %3 : vector<8x128xf32>
    %6 = arith.mulf %4, %4 : vector<8x128xf32>
    %7 = arith.addf %5, %6 : vector<8x128xf32>
    %c0_6 = arith.constant 0 : index
    %c0_7 = arith.constant 0 : index
    %8 = vector.load %arg5[%c0_6, %c0_7] : memref<8x128xf32, #tpu.memory_space<vmem>>, vector<8x128xf32>
    tpu.vector_store %arg5[%c0_6, %c0_7], %7 {strides = array<i32>} : memref<8x128xf32, #tpu.memory_space<vmem>>, vector<8x128xf32>,
    %c0_8 = arith.constant 0 : index
    %c0_9 = arith.constant 0 : index
    %9 = vector.load %arg5[%c0_8, %c0_9] : memref<8x128xf32, #tpu.memory_space<vmem>>, vector<8x128xf32>
    %c0_10 = arith.constant 0 : index
    %c64 = arith.constant 64 : index
    %10 = vector.load %arg2[%c0_10, %c64] : memref<8x576xf32, #tpu.memory_space<vmem>>, vector<8x128xf32>
    %cst_11 = arith.constant dense<0.000000e+00> : vector<8x128xf32>
    %11 = tpu.matmul %10, %0, %cst_11 {dimension_numbers = #tpu.dot_dimension_numbers<[1], [0], [0], [1], [0, 0, 1, 1], [], []>} : vector<8x128xf32>, vector<128x128xf32>, vector<8x128xf32> -> vector<8x128xf32>
    %cst_12 = arith.constant dense<0.000000e+00> : vector<8x128xf32>
    %12 = tpu.matmul %10, %1, %cst_12 {dimension_numbers = #tpu.dot_dimension_numbers<[1], [0], [0], [1], [0, 0, 1, 1], [], []>} : vector<8x128xf32>, vector<128x128xf32>, vector<8x128xf32> -> vector<8x128xf32>
    %13 = arith.mulf %11, %11 : vector<8x128xf32>
    %14 = arith.mulf %12, %12 : vector<8x128xf32>
    %15 = arith.addf %13, %14 : vector<8x128xf32>
    %16 = arith.addf %9, %15 : vector<8x128xf32>
    %c0_13 = arith.constant 0 : index
    %c0_14 = arith.constant 0 : index
    %17 = vector.load %arg5[%c0_13, %c0_14] : memref<8x128xf32, #tpu.memory_space<vmem>>, vector<8x128xf32>
    tpu.vector_store %arg5[%c0_13, %c0_14], %16 {strides = array<i32>} : memref<8x128xf32, #tpu.memory_space<vmem>>, vector<8x128xf32>,
    %c0_15 = arith.constant 0 : index
    %c0_16 = arith.constant 0 : index
    %18 = vector.load %arg5[%c0_15, %c0_16] : memref<8x128xf32, #tpu.memory_space<vmem>>, vector<8x128xf32>
    %c0_17 = arith.constant 0 : index
    %c128 = arith.constant 128 : index
    %19 = vector.load %arg2[%c0_17, %c128] : memref<8x576xf32, #tpu.memory_space<vmem>>, vector<8x128xf32>
    %cst_18 = arith.constant dense<0.000000e+00> : vector<8x128xf32>
    %20 = tpu.matmul %19, %0, %cst_18 {dimension_numbers = #tpu.dot_dimension_numbers<[1], [0], [0], [1], [0, 0, 1, 1], [], []>} : vector<8x128xf32>, vector<128x128xf32>, vector<8x128xf32> -> vector<8x128xf32>
    %cst_19 = arith.constant dense<0.000000e+00> : vector<8x128xf32>
    %21 = tpu.matmul %19, %1, %cst_19 {dimension_numbers = #tpu.dot_dimension_numbers<[1], [0], [0], [1], [0, 0, 1, 1], [], []>} : vector<8x128xf32>, vector<128x128xf32>, vector<8x128xf32> -> vector<8x128xf32>
    %22 = arith.mulf %20, %20 : vector<8x128xf32>
    %23 = arith.mulf %21, %21 : vector<8x128xf32>
    %24 = arith.addf %22, %23 : vector<8x128xf32>
    %25 = arith.addf %18, %24 : vector<8x128xf32>
    %c0_20 = arith.constant 0 : index
    %c0_21 = arith.constant 0 : index
    %26 = vector.load %arg5[%c0_20, %c0_21] : memref<8x128xf32, #tpu.memory_space<vmem>>, vector<8x128xf32>
    tpu.vector_store %arg5[%c0_20, %c0_21], %25 {strides = array<i32>} : memref<8x128xf32, #tpu.memory_space<vmem>>, vector<8x128xf32>,
    %c0_22 = arith.constant 0 : index
    %c0_23 = arith.constant 0 : index
    %27 = vector.load %arg5[%c0_22, %c0_23] : memref<8x128xf32, #tpu.memory_space<vmem>>, vector<8x128xf32>
    %c0_24 = arith.constant 0 : index
    %c192 = arith.constant 192 : index
    %28 = vector.load %arg2[%c0_24, %c192] : memref<8x576xf32, #tpu.memory_space<vmem>>, vector<8x128xf32>
    %cst_25 = arith.constant dense<0.000000e+00> : vector<8x128xf32>
    %29 = tpu.matmul %28, %0, %cst_25 {dimension_numbers = #tpu.dot_dimension_numbers<[1], [0], [0], [1], [0, 0, 1, 1], [], []>} : vector<8x128xf32>, vector<128x128xf32>, vector<8x128xf32> -> vector<8x128xf32>
    %cst_26 = arith.constant dense<0.000000e+00> : vector<8x128xf32>
    %30 = tpu.matmul %28, %1, %cst_26 {dimension_numbers = #tpu.dot_dimension_numbers<[1], [0], [0], [1], [0, 0, 1, 1], [], []>} : vector<8x128xf32>, vector<128x128xf32>, vector<8x128xf32> -> vector<8x128xf32>
    %31 = arith.mulf %29, %29 : vector<8x128xf32>
    %32 = arith.mulf %30, %30 : vector<8x128xf32>
    %33 = arith.addf %31, %32 : vector<8x128xf32>
    %34 = arith.addf %27, %33 : vector<8x128xf32>
    %c0_27 = arith.constant 0 : index
    %c0_28 = arith.constant 0 : index
    %35 = vector.load %arg5[%c0_27, %c0_28] : memref<8x128xf32, #tpu.memory_space<vmem>>, vector<8x128xf32>
    tpu.vector_store %arg5[%c0_27, %c0_28], %34 {strides = array<i32>} : memref<8x128xf32, #tpu.memory_space<vmem>>, vector<8x128xf32>,
    %c0_29 = arith.constant 0 : index
    %c0_30 = arith.constant 0 : index
    %36 = vector.load %arg5[%c0_29, %c0_30] : memref<8x128xf32, #tpu.memory_space<vmem>>, vector<8x128xf32>
    %c0_31 = arith.constant 0 : index
    %c256 = arith.constant 256 : index
    %37 = vector.load %arg2[%c0_31, %c256] : memref<8x576xf32, #tpu.memory_space<vmem>>, vector<8x128xf32>
    %cst_32 = arith.constant dense<0.000000e+00> : vector<8x128xf32>
    %38 = tpu.matmul %37, %0, %cst_32 {dimension_numbers = #tpu.dot_dimension_numbers<[1], [0], [0], [1], [0, 0, 1, 1], [], []>} : vector<8x128xf32>, vector<128x128xf32>, vector<8x128xf32> -> vector<8x128xf32>
    %cst_33 = arith.constant dense<0.000000e+00> : vector<8x128xf32>
    %39 = tpu.matmul %37, %1, %cst_33 {dimension_numbers = #tpu.dot_dimension_numbers<[1], [0], [0], [1], [0, 0, 1, 1], [], []>} : vector<8x128xf32>, vector<128x128xf32>, vector<8x128xf32> -> vector<8x128xf32>
    %40 = arith.mulf %38, %38 : vector<8x128xf32>
    %41 = arith.mulf %39, %39 : vector<8x128xf32>
    %42 = arith.addf %40, %41 : vector<8x128xf32>
    %43 = arith.addf %36, %42 : vector<8x128xf32>
    %c0_34 = arith.constant 0 : index
    %c0_35 = arith.constant 0 : index
    %44 = vector.load %arg5[%c0_34, %c0_35] : memref<8x128xf32, #tpu.memory_space<vmem>>, vector<8x128xf32>
    tpu.vector_store %arg5[%c0_34, %c0_35], %43 {strides = array<i32>} : memref<8x128xf32, #tpu.memory_space<vmem>>, vector<8x128xf32>,
    %c0_36 = arith.constant 0 : index
    %c0_37 = arith.constant 0 : index
    %45 = vector.load %arg5[%c0_36, %c0_37] : memref<8x128xf32, #tpu.memory_space<vmem>>, vector<8x128xf32>
    %c0_38 = arith.constant 0 : index
    %c320 = arith.constant 320 : index
    %46 = vector.load %arg2[%c0_38, %c320] : memref<8x576xf32, #tpu.memory_space<vmem>>, vector<8x128xf32>
    %cst_39 = arith.constant dense<0.000000e+00> : vector<8x128xf32>
    %47 = tpu.matmul %46, %0, %cst_39 {dimension_numbers = #tpu.dot_dimension_numbers<[1], [0], [0], [1], [0, 0, 1, 1], [], []>} : vector<8x128xf32>, vector<128x128xf32>, vector<8x128xf32> -> vector<8x128xf32>
    %cst_40 = arith.constant dense<0.000000e+00> : vector<8x128xf32>
    %48 = tpu.matmul %46, %1, %cst_40 {dimension_numbers = #tpu.dot_dimension_numbers<[1], [0], [0], [1], [0, 0, 1, 1], [], []>} : vector<8x128xf32>, vector<128x128xf32>, vector<8x128xf32> -> vector<8x128xf32>
    %49 = arith.mulf %47, %47 : vector<8x128xf32>
    %50 = arith.mulf %48, %48 : vector<8x128xf32>
    %51 = arith.addf %49, %50 : vector<8x128xf32>
    %52 = arith.addf %45, %51 : vector<8x128xf32>
    %c0_41 = arith.constant 0 : index
    %c0_42 = arith.constant 0 : index
    %53 = vector.load %arg5[%c0_41, %c0_42] : memref<8x128xf32, #tpu.memory_space<vmem>>, vector<8x128xf32>
    tpu.vector_store %arg5[%c0_41, %c0_42], %52 {strides = array<i32>} : memref<8x128xf32, #tpu.memory_space<vmem>>, vector<8x128xf32>,
    %c0_43 = arith.constant 0 : index
    %c0_44 = arith.constant 0 : index
    %54 = vector.load %arg5[%c0_43, %c0_44] : memref<8x128xf32, #tpu.memory_space<vmem>>, vector<8x128xf32>
    %c0_45 = arith.constant 0 : index
    %c384 = arith.constant 384 : index
    %55 = vector.load %arg2[%c0_45, %c384] : memref<8x576xf32, #tpu.memory_space<vmem>>, vector<8x128xf32>
    %cst_46 = arith.constant dense<0.000000e+00> : vector<8x128xf32>
    %56 = tpu.matmul %55, %0, %cst_46 {dimension_numbers = #tpu.dot_dimension_numbers<[1], [0], [0], [1], [0, 0, 1, 1], [], []>} : vector<8x128xf32>, vector<128x128xf32>, vector<8x128xf32> -> vector<8x128xf32>
    %cst_47 = arith.constant dense<0.000000e+00> : vector<8x128xf32>
    %57 = tpu.matmul %55, %1, %cst_47 {dimension_numbers = #tpu.dot_dimension_numbers<[1], [0], [0], [1], [0, 0, 1, 1], [], []>} : vector<8x128xf32>, vector<128x128xf32>, vector<8x128xf32> -> vector<8x128xf32>
    %58 = arith.mulf %56, %56 : vector<8x128xf32>
    %59 = arith.mulf %57, %57 : vector<8x128xf32>
    %60 = arith.addf %58, %59 : vector<8x128xf32>
    %61 = arith.addf %54, %60 : vector<8x128xf32>
    %c0_48 = arith.constant 0 : index
    %c0_49 = arith.constant 0 : index
    %62 = vector.load %arg5[%c0_48, %c0_49] : memref<8x128xf32, #tpu.memory_space<vmem>>, vector<8x128xf32>
    tpu.vector_store %arg5[%c0_48, %c0_49], %61 {strides = array<i32>} : memref<8x128xf32, #tpu.memory_space<vmem>>, vector<8x128xf32>,
    %c0_50 = arith.constant 0 : index
    %c0_51 = arith.constant 0 : index
    %63 = vector.load %arg5[%c0_50, %c0_51] : memref<8x128xf32, #tpu.memory_space<vmem>>, vector<8x128xf32>
    %c0_52 = arith.constant 0 : index
    %c448 = arith.constant 448 : index
    %64 = vector.load %arg2[%c0_52, %c448] : memref<8x576xf32, #tpu.memory_space<vmem>>, vector<8x128xf32>
    %cst_53 = arith.constant dense<0.000000e+00> : vector<8x128xf32>
    %65 = tpu.matmul %64, %0, %cst_53 {dimension_numbers = #tpu.dot_dimension_numbers<[1], [0], [0], [1], [0, 0, 1, 1], [], []>} : vector<8x128xf32>, vector<128x128xf32>, vector<8x128xf32> -> vector<8x128xf32>
    %cst_54 = arith.constant dense<0.000000e+00> : vector<8x128xf32>
    %66 = tpu.matmul %64, %1, %cst_54 {dimension_numbers = #tpu.dot_dimension_numbers<[1], [0], [0], [1], [0, 0, 1, 1], [], []>} : vector<8x128xf32>, vector<128x128xf32>, vector<8x128xf32> -> vector<8x128xf32>
    %67 = arith.mulf %65, %65 : vector<8x128xf32>
    %68 = arith.mulf %66, %66 : vector<8x128xf32>
    %69 = arith.addf %67, %68 : vector<8x128xf32>
    %70 = arith.addf %63, %69 : vector<8x128xf32>
    %c0_55 = arith.constant 0 : index
    %c0_56 = arith.constant 0 : index
    %71 = vector.load %arg5[%c0_55, %c0_56] : memref<8x128xf32, #tpu.memory_space<vmem>>, vector<8x128xf32>
    tpu.vector_store %arg5[%c0_55, %c0_56], %70 {strides = array<i32>} : memref<8x128xf32, #tpu.memory_space<vmem>>, vector<8x128xf32>,
    return
  }
  func.func @transform_0(%arg0: i32, %arg1: i32) -> (i32, i32) {
    %c0_i32 = arith.constant 0 : i32
    %c0_i32_0 = arith.constant 0 : i32
    return %arg0, %c0_i32 : i32, i32
  }
  func.func @transform_1(%arg0: i32, %arg1: i32) -> (i32, i32) {
    %c0_i32 = arith.constant 0 : i32
    %c0_i32_0 = arith.constant 0 : i32
    return %c0_i32, %arg1 : i32, i32
  }
  func.func @transform_2(%arg0: i32, %arg1: i32) -> (i32, i32) {
    %c0_i32 = arith.constant 0 : i32
    %c0_i32_0 = arith.constant 0 : i32
    return %c0_i32, %arg1 : i32, i32
  }
  func.func @transform_3(%arg0: i32, %arg1: i32) -> (i32, i32) {
    %c0_i32 = arith.constant 0 : i32
    return %arg0, %arg1 : i32, i32
  }
}

</mosaic_0001>

<llo_original>
// kernel: tpu_custom_call.1
$region0: #{tpu_custom_call.1}
  #allocation0 [shape = 'u32[]', space=smem, size = 0x4, offset = 0x4, fixed_abs, tag = 'smem constant byte address 0x4 - core index']
  #allocation1 [shape = 'u32[144,128]{1,0:T(1,128)}', space=vmem, size = 0x12000, scoped, tag = 'internal scratch']
  %s0 = inlined_call_operand.hbm [shape: f32[8,576], index: 0, kind: input, shape index: {}]
  %s1 = inlined_call_operand.hbm [shape: f32[128,128], index: 1, kind: input, shape index: {}]
  %s2 = inlined_call_operand.hbm [shape: f32[128,128], index: 2, kind: input, shape index: {}]
  %s3 = inlined_call_operand.hbm [shape: f32[8,128], index: 3, kind: output, shape index: {}]
  %s4 = sld [smem:[#allocation0]]
  $region34: #{tpu_custom_call.1} parent=0
    _
  %s6 = ssub.s32 1, %s4
  %s7 = scalar_select 0, %s6, %s4
  $region1: #{tpu_custom_call.1} parent=0
    #allocation2 [shape = 'u8[20480]{0}', space=vmem, size = 0x5000, scoped, tag = 'input window, operand 0, single buffered']
    #allocation3 [shape = 's32[1]{0}', space=sflag, size = 0x4, scoped, tag = 'scoped memory for tpu_custom_call.1']
    #allocation4 [shape = 's32[1]{0}', space=sflag, size = 0x4, scoped, tag = 'scoped memory for tpu_custom_call.1']
    #allocation5 [shape = 'u8[65536]{0}', space=vmem, size = 0x10000, scoped, tag = 'input window, operand 1, single buffered']
    #allocation6 [shape = 's32[1]{0}', space=sflag, size = 0x4, scoped, tag = 'scoped memory for tpu_custom_call.1']
    #allocation7 [shape = 'u8[65536]{0}', space=vmem, size = 0x10000, scoped, tag = 'input window, operand 2, single buffered']
    #allocation8 [shape = 'u8[4096]{0}', space=vmem, size = 0x1000, scoped, tag = 'output window, operand 0, single buffered']
    %8 = vsyncpa [#allocation3], 0
    %9 = vsyncpa [#allocation6], 0
    %10 = vsyncpa [#allocation4], 0
    // Predicated region
    $region2: #{tpu_custom_call.1} parent=1 // pred_check
      _
    $region3: #{tpu_custom_call.1} parent=1 // pred_check_branch
      %12 = sbr.rel (0) target = $region5
    $region4: #{tpu_custom_call.1} parent=1 // pred_region
      %s14 = ssub.s32 640, 640
      %15 = vsyncadd [#allocation3], %s14
      %s17 = sshll.u32 [#allocation2], 4
      %s18 = int_to_ptr.vmem [resolvable:$true] %s17
      %20 = dma.hbm_to_vmem [thread:$0]  %s0, 640, %s18, [#allocation3]
    $region5: #{tpu_custom_call.1} parent=1 // pred_fallthru
      _
    // Predicated region
    $region6: #{tpu_custom_call.1} parent=1 // pred_check
      _
    $region7: #{tpu_custom_call.1} parent=1 // pred_check_branch
      %22 = sbr.rel (0) target = $region9
    $region8: #{tpu_custom_call.1} parent=1 // pred_region
      %s24 = ssub.s32 2048, 2048
      %25 = vsyncadd [#allocation6], %s24
      %s26 = sshll.u32 [#allocation5], 4
      %s27 = int_to_ptr.vmem [resolvable:$true] %s26
      %32 = dma.hbm_to_vmem [thread:$0]  %s1, 2048, %s27, [#allocation6], 128, 128, 8
    $region9: #{tpu_custom_call.1} parent=1 // pred_fallthru
      _
    // Predicated region
    $region10: #{tpu_custom_call.1} parent=1 // pred_check
      _
    $region11: #{tpu_custom_call.1} parent=1 // pred_check_branch
      %34 = sbr.rel (0) target = $region13
    $region12: #{tpu_custom_call.1} parent=1 // pred_region
      %s36 = ssub.s32 2048, 2048
      %37 = vsyncadd [#allocation6], %s36
      %s38 = sshll.u32 [#allocation7], 4
      %s39 = int_to_ptr.vmem [resolvable:$true] %s38
      %44 = dma.hbm_to_vmem [thread:$0]  %s2, 2048, %s39, [#allocation6], 128, 128, 8
    $region13: #{tpu_custom_call.1} parent=1 // pred_fallthru
      _
    // Predicated region
    $region14: #{tpu_custom_call.1} parent=1 // pred_check
      _
    $region15: #{tpu_custom_call.1} parent=1 // pred_check_branch
      %46 = sbr.rel (0) target = $region17
    $region16: #{tpu_custom_call.1} parent=1 // pred_region
      %47 = dma.done [#allocation3], 640
    $region17: #{tpu_custom_call.1} parent=1 // pred_fallthru
      _
    // Predicated region
    $region18: #{tpu_custom_call.1} parent=1 // pred_check
      _
    $region19: #{tpu_custom_call.1} parent=1 // pred_check_branch
      %49 = sbr.rel (0) target = $region21
    $region20: #{tpu_custom_call.1} parent=1 // pred_region
      %50 = dma.done [#allocation6], 2048
    $region21: #{tpu_custom_call.1} parent=1 // pred_fallthru
      _
    // Predicated region
    $region22: #{tpu_custom_call.1} parent=1 // pred_check
      _
    $region23: #{tpu_custom_call.1} parent=1 // pred_check_branch
      %52 = sbr.rel (0) target = $region25
    $region24: #{tpu_custom_call.1} parent=1 // pred_region
      %53 = dma.done [#allocation6], 2048
    $region25: #{tpu_custom_call.1} parent=1 // pred_fallthru
      _
    %v54 = vld [vmem:[#allocation5] sm:$0xff]
    %v55 = vld [vmem:[#allocation5 + $0x8] sm:$0xff]
    %v56 = vld [vmem:[#allocation5 + $0x10] sm:$0xff]
    %v57 = vld [vmem:[#allocation5 + $0x18] sm:$0xff]
    %v58 = vld [vmem:[#allocation5 + $0x20] sm:$0xff]
    %v59 = vld [vmem:[#allocation5 + $0x28] sm:$0xff]
    %v60 = vld [vmem:[#allocation5 + $0x30] sm:$0xff]
    %v61 = vld [vmem:[#allocation5 + $0x38] sm:$0xff]
    %v62 = vld [vmem:[#allocation5 + $0x40] sm:$0xff]
    %v63 = vld [vmem:[#allocation5 + $0x48] sm:$0xff]
    %v64 = vld [vmem:[#allocation5 + $0x50] sm:$0xff]
    %v65 = vld [vmem:[#allocation5 + $0x58] sm:$0xff]
    %v66 = vld [vmem:[#allocation5 + $0x60] sm:$0xff]
    %v67 = vld [vmem:[#allocation5 + $0x68] sm:$0xff]
    %v68 = vld [vmem:[#allocation5 + $0x70] sm:$0xff]
    %v69 = vld [vmem:[#allocation5 + $0x78] sm:$0xff]
    %v70 = vld [vmem:[#allocation7] sm:$0xff]
    %v71 = vld [vmem:[#allocation7 + $0x8] sm:$0xff]
    %v72 = vld [vmem:[#allocation7 + $0x10] sm:$0xff]
    %v73 = vld [vmem:[#allocation7 + $0x18] sm:$0xff]
    %v74 = vld [vmem:[#allocation7 + $0x20] sm:$0xff]
    %v75 = vld [vmem:[#allocation7 + $0x28] sm:$0xff]
    %v76 = vld [vmem:[#allocation7 + $0x30] sm:$0xff]
    %v77 = vld [vmem:[#allocation7 + $0x38] sm:$0xff]
    %v78 = vld [vmem:[#allocation7 + $0x40] sm:$0xff]
    %v79 = vld [vmem:[#allocation7 + $0x48] sm:$0xff]
    %v80 = vld [vmem:[#allocation7 + $0x50] sm:$0xff]
    %v81 = vld [vmem:[#allocation7 + $0x58] sm:$0xff]
    %v82 = vld [vmem:[#allocation7 + $0x60] sm:$0xff]
    %v83 = vld [vmem:[#allocation7 + $0x68] sm:$0xff]
    %v84 = vld [vmem:[#allocation7 + $0x70] sm:$0xff]
    %v85 = vld [vmem:[#allocation7 + $0x78] sm:$0xff]
    %v86 = vld [vmem:[#allocation2] sm:$0xff]
    %87 = vmatprep.subr.mxu0 0.0
    %88 = vmatpush1.msra.mxu0 %v54
    %89 = vmatprep.subr.mxu0 0.0
    %90 = vmatpush1.msra.mxu0 %v55
    %91 = vmatprep.subr.mxu0 0.0
    %92 = vmatpush1.msra.mxu0 %v56
    %93 = vmatprep.subr.mxu0 0.0
    %94 = vmatpush1.msra.mxu0 %v57
    %95 = vmatprep.subr.mxu0 0.0
    %96 = vmatpush1.msra.mxu0 %v58
    %97 = vmatprep.subr.mxu0 0.0
    %98 = vmatpush1.msra.mxu0 %v59
    %99 = vmatprep.subr.mxu0 0.0
    %100 = vmatpush1.msra.mxu0 %v60
    %101 = vmatprep.subr.mxu0 0.0
    %102 = vmatpush1.msra.mxu0 %v61
    %103 = vmatprep.subr.mxu0 0.0
    %104 = vmatpush1.msra.mxu0 %v62
    %105 = vmatprep.subr.mxu0 0.0
    %106 = vmatpush1.msra.mxu0 %v63
    %107 = vmatprep.subr.mxu0 0.0
    %108 = vmatpush1.msra.mxu0 %v64
    %109 = vmatprep.subr.mxu0 0.0
    %110 = vmatpush1.msra.mxu0 %v65
    %111 = vmatprep.subr.mxu0 0.0
    %112 = vmatpush1.msra.mxu0 %v66
    %113 = vmatprep.subr.mxu0 0.0
    %114 = vmatpush1.msra.mxu0 %v67
    %115 = vmatprep.subr.mxu0 0.0
    %116 = vmatpush1.msra.mxu0 %v68
    %117 = vmatprep.subr.mxu0 0.0
    %118 = vmatpush1.msra.mxu0 %v69
    %119 = vmatprep.subr.mxu0 0.0
    %120 = vmatpush1.msra.mxu0 0.0
    %121 = vmatprep.subr.mxu0 0.0
    %122 = vmatpush1.msra.mxu0 0.0
    %123 = vmatprep.subr.mxu0 0.0
    %124 = vmatpush1.msra.mxu0 0.0
    %125 = vmatprep.subr.mxu0 0.0
    %126 = vmatpush1.msra.mxu0 0.0
    %127 = vmatprep.subr.mxu0 0.0
    %128 = vmatpush1.msra.mxu0 0.0
    %129 = vmatprep.subr.mxu0 0.0
    %130 = vmatpush1.msra.mxu0 0.0
    %131 = vmatprep.subr.mxu0 0.0
    %132 = vmatpush1.msra.mxu0 0.0
    %133 = vmatprep.subr.mxu0 0.0
    %134 = vmatpush1.msra.mxu0 0.0
    %135 = vmatprep.subr.mxu0 0.0
    %136 = vmatpush1.msra.mxu0 0.0
    %137 = vmatprep.subr.mxu0 0.0
    %138 = vmatpush1.msra.mxu0 0.0
    %139 = vmatprep.subr.mxu0 0.0
    %140 = vmatpush1.msra.mxu0 0.0
    %141 = vmatprep.subr.mxu0 0.0
    %142 = vmatpush1.msra.mxu0 0.0
    %143 = vmatprep.subr.mxu0 0.0
    %144 = vmatpush1.msra.mxu0 0.0
    %145 = vmatprep.subr.mxu0 0.0
    %146 = vmatpush1.msra.mxu0 0.0
    %147 = vmatprep.subr.mxu0 0.0
    %148 = vmatpush1.msra.mxu0 0.0
    %149 = vmatprep.subr.mxu0 0.0
    %150 = vmatpush1.msra.mxu0 0.0
    %151 = vmatprep.mubr.f32.mxu0 0.0
    %152 = vmatmul.mubr.f32.gmra.mrb[0].mxu0 %v86
    %v153 = vpop.f32.mrb[0].mxu0
    %v154 = vadd.f32 0.0, %v153
    %v155 = vpop.f32.mrb[0].mxu0
    %156 = vdwg.mxu0
    %157 = vmatprep.subr.mxu0 0.0
    %158 = vmatpush1.msra.mxu0 %v70
    %159 = vmatprep.subr.mxu0 0.0
    %160 = vmatpush1.msra.mxu0 %v71
    %161 = vmatprep.subr.mxu0 0.0
    %162 = vmatpush1.msra.mxu0 %v72
    %163 = vmatprep.subr.mxu0 0.0
    %164 = vmatpush1.msra.mxu0 %v73
    %165 = vmatprep.subr.mxu0 0.0
    %166 = vmatpush1.msra.mxu0 %v74
    %167 = vmatprep.subr.mxu0 0.0
    %168 = vmatpush1.msra.mxu0 %v75
    %169 = vmatprep.subr.mxu0 0.0
    %170 = vmatpush1.msra.mxu0 %v76
    %171 = vmatprep.subr.mxu0 0.0
    %172 = vmatpush1.msra.mxu0 %v77
    %173 = vmatprep.subr.mxu0 0.0
    %174 = vmatpush1.msra.mxu0 %v78
    %175 = vmatprep.subr.mxu0 0.0
    %176 = vmatpush1.msra.mxu0 %v79
    %177 = vmatprep.subr.mxu0 0.0
    %178 = vmatpush1.msra.mxu0 %v80
    %179 = vmatprep.subr.mxu0 0.0
    %180 = vmatpush1.msra.mxu0 %v81
    %181 = vmatprep.subr.mxu0 0.0
    %182 = vmatpush1.msra.mxu0 %v82
    %183 = vmatprep.subr.mxu0 0.0
    %184 = vmatpush1.msra.mxu0 %v83
    %185 = vmatprep.subr.mxu0 0.0
    %186 = vmatpush1.msra.mxu0 %v84
    %187 = vmatprep.subr.mxu0 0.0
    %188 = vmatpush1.msra.mxu0 %v85
    %189 = vmatprep.subr.mxu0 0.0
    %190 = vmatpush1.msra.mxu0 0.0
    %191 = vmatprep.subr.mxu0 0.0
    %192 = vmatpush1.msra.mxu0 0.0
    %193 = vmatprep.subr.mxu0 0.0
    %194 = vmatpush1.msra.mxu0 0.0
    %195 = vmatprep.subr.mxu0 0.0
    %196 = vmatpush1.msra.mxu0 0.0
    %197 = vmatprep.subr.mxu0 0.0
    %198 = vmatpush1.msra.mxu0 0.0
    %199 = vmatprep.subr.mxu0 0.0
    %200 = vmatpush1.msra.mxu0 0.0
    %201 = vmatprep.subr.mxu0 0.0
    %202 = vmatpush1.msra.mxu0 0.0
    %203 = vmatprep.subr.mxu0 0.0
    %204 = vmatpush1.msra.mxu0 0.0
    %205 = vmatprep.subr.mxu0 0.0
    %206 = vmatpush1.msra.mxu0 0.0
    %207 = vmatprep.subr.mxu0 0.0
    %208 = vmatpush1.msra.mxu0 0.0
    %209 = vmatprep.subr.mxu0 0.0
    %210 = vmatpush1.msra.mxu0 0.0
    %211 = vmatprep.subr.mxu0 0.0
    %212 = vmatpush1.msra.mxu0 0.0
    %213 = vmatprep.subr.mxu0 0.0
    %214 = vmatpush1.msra.mxu0 0.0
    %215 = vmatprep.subr.mxu0 0.0
    %216 = vmatpush1.msra.mxu0 0.0
    %217 = vmatprep.subr.mxu0 0.0
    %218 = vmatpush1.msra.mxu0 0.0
    %219 = vmatprep.subr.mxu0 0.0
    %220 = vmatpush1.msra.mxu0 0.0
    %221 = vmatprep.mubr.f32.mxu0 0.0
    %222 = vmatmul.mubr.f32.gmra.mrb[0].mxu0 %v86
    %v223 = vpop.f32.mrb[0].mxu0
    %v224 = vadd.f32 0.0, %v223
    %v225 = vpop.f32.mrb[0].mxu0
    %226 = vdwg.mxu0
    %v227 = vmul.f32 %v154, %v154
    %v228 = vmul.f32 %v224, %v224
    %v229 = vadd.f32 %v227, %v228
    %230 = vst [vmem:[#allocation8] sm:$0xff] %v229
    %v231 = vld [vmem:[#allocation8] sm:$0xff]
    %v232 = vld [vmem:[#allocation2] sm:$0xff]
    %v233 = vld [vmem:[#allocation2 + $0x8] sm:$0xff]
    %236 = vrot.lane.b32.xlu0 %v232, 64
    %v237 = vpop.permute.xlu0 %236
    %238 = vrot.lane.b32.xlu0 %v233, 64
    %v239 = vpop.permute.xlu0 %238
    %vm240 = vcmask 523264
    %v241 = vsel %vm240, %v237, %v239
    %243 = vmatprep.subr.mxu0 0.0
    %244 = vmatpush1.msra.mxu0 %v54
    %245 = vmatprep.subr.mxu0 0.0
    %246 = vmatpush1.msra.mxu0 %v55
    %247 = vmatprep.subr.mxu0 0.0
    %248 = vmatpush1.msra.mxu0 %v56
    %249 = vmatprep.subr.mxu0 0.0
    %250 = vmatpush1.msra.mxu0 %v57
    %251 = vmatprep.subr.mxu0 0.0
    %252 = vmatpush1.msra.mxu0 %v58
    %253 = vmatprep.subr.mxu0 0.0
    %254 = vmatpush1.msra.mxu0 %v59
    %255 = vmatprep.subr.mxu0 0.0
    %256 = vmatpush1.msra.mxu0 %v60
    %257 = vmatprep.subr.mxu0 0.0
    %258 = vmatpush1.msra.mxu0 %v61
    %259 = vmatprep.subr.mxu0 0.0
    %260 = vmatpush1.msra.mxu0 %v62
    %261 = vmatprep.subr.mxu0 0.0
    %262 = vmatpush1.msra.mxu0 %v63
    %263 = vmatprep.subr.mxu0 0.0
    %264 = vmatpush1.msra.mxu0 %v64
    %265 = vmatprep.subr.mxu0 0.0
    %266 = vmatpush1.msra.mxu0 %v65
    %267 = vmatprep.subr.mxu0 0.0
    %268 = vmatpush1.msra.mxu0 %v66
    %269 = vmatprep.subr.mxu0 0.0
    %270 = vmatpush1.msra.mxu0 %v67
    %271 = vmatprep.subr.mxu0 0.0
    %272 = vmatpush1.msra.mxu0 %v68
    %273 = vmatprep.subr.mxu0 0.0
    %274 = vmatpush1.msra.mxu0 %v69
    %275 = vmatprep.subr.mxu0 0.0
    %276 = vmatpush1.msra.mxu0 0.0
    %277 = vmatprep.subr.mxu0 0.0
    %278 = vmatpush1.msra.mxu0 0.0
    %279 = vmatprep.subr.mxu0 0.0
    %280 = vmatpush1.msra.mxu0 0.0
    %281 = vmatprep.subr.mxu0 0.0
    %282 = vmatpush1.msra.mxu0 0.0
    %283 = vmatprep.subr.mxu0 0.0
    %284 = vmatpush1.msra.mxu0 0.0
    %285 = vmatprep.subr.mxu0 0.0
    %286 = vmatpush1.msra.mxu0 0.0
    %287 = vmatprep.subr.mxu0 0.0
    %288 = vmatpush1.msra.mxu0 0.0
    %289 = vmatprep.subr.mxu0 0.0
    %290 = vmatpush1.msra.mxu0 0.0
    %291 = vmatprep.subr.mxu0 0.0
    %292 = vmatpush1.msra.mxu0 0.0
    %293 = vmatprep.subr.mxu0 0.0
    %294 = vmatpush1.msra.mxu0 0.0
    %295 = vmatprep.subr.mxu0 0.0
    %296 = vmatpush1.msra.mxu0 0.0
    %297 = vmatprep.subr.mxu0 0.0
    %298 = vmatpush1.msra.mxu0 0.0
    %299 = vmatprep.subr.mxu0 0.0
    %300 = vmatpush1.msra.mxu0 0.0
    %301 = vmatprep.subr.mxu0 0.0
    %302 = vmatpush1.msra.mxu0 0.0
    %303 = vmatprep.subr.mxu0 0.0
    %304 = vmatpush1.msra.mxu0 0.0
    %305 = vmatprep.subr.mxu0 0.0
    %306 = vmatpush1.msra.mxu0 0.0
    %307 = vmatprep.mubr.f32.mxu0 0.0
    %308 = vmatmul.mubr.f32.gmra.mrb[0].mxu0 %v241
    %v309 = vpop.f32.mrb[0].mxu0
    %v310 = vadd.f32 0.0, %v309
    %v311 = vpop.f32.mrb[0].mxu0
    %312 = vdwg.mxu0
    %313 = vmatprep.subr.mxu0 0.0
    %314 = vmatpush1.msra.mxu0 %v70
    %315 = vmatprep.subr.mxu0 0.0
    %316 = vmatpush1.msra.mxu0 %v71
    %317 = vmatprep.subr.mxu0 0.0
    %318 = vmatpush1.msra.mxu0 %v72
    %319 = vmatprep.subr.mxu0 0.0
    %320 = vmatpush1.msra.mxu0 %v73
    %321 = vmatprep.subr.mxu0 0.0
    %322 = vmatpush1.msra.mxu0 %v74
    %323 = vmatprep.subr.mxu0 0.0
    %324 = vmatpush1.msra.mxu0 %v75
    %325 = vmatprep.subr.mxu0 0.0
    %326 = vmatpush1.msra.mxu0 %v76
    %327 = vmatprep.subr.mxu0 0.0
    %328 = vmatpush1.msra.mxu0 %v77
    %329 = vmatprep.subr.mxu0 0.0
    %330 = vmatpush1.msra.mxu0 %v78
    %331 = vmatprep.subr.mxu0 0.0
    %332 = vmatpush1.msra.mxu0 %v79
    %333 = vmatprep.subr.mxu0 0.0
    %334 = vmatpush1.msra.mxu0 %v80
    %335 = vmatprep.subr.mxu0 0.0
    %336 = vmatpush1.msra.mxu0 %v81
    %337 = vmatprep.subr.mxu0 0.0
    %338 = vmatpush1.msra.mxu0 %v82
    %339 = vmatprep.subr.mxu0 0.0
    %340 = vmatpush1.msra.mxu0 %v83
    %341 = vmatprep.subr.mxu0 0.0
    %342 = vmatpush1.msra.mxu0 %v84
    %343 = vmatprep.subr.mxu0 0.0
    %344 = vmatpush1.msra.mxu0 %v85
    %345 = vmatprep.subr.mxu0 0.0
    %346 = vmatpush1.msra.mxu0 0.0
    %347 = vmatprep.subr.mxu0 0.0
    %348 = vmatpush1.msra.mxu0 0.0
    %349 = vmatprep.subr.mxu0 0.0
    %350 = vmatpush1.msra.mxu0 0.0
    %351 = vmatprep.subr.mxu0 0.0
    %352 = vmatpush1.msra.mxu0 0.0
    %353 = vmatprep.subr.mxu0 0.0
    %354 = vmatpush1.msra.mxu0 0.0
    %355 = vmatprep.subr.mxu0 0.0
    %356 = vmatpush1.msra.mxu0 0.0
    %357 = vmatprep.subr.mxu0 0.0
    %358 = vmatpush1.msra.mxu0 0.0
    %359 = vmatprep.subr.mxu0 0.0
    %360 = vmatpush1.msra.mxu0 0.0
    %361 = vmatprep.subr.mxu0 0.0
    %362 = vmatpush1.msra.mxu0 0.0
    %363 = vmatprep.subr.mxu0 0.0
    %364 = vmatpush1.msra.mxu0 0.0
    %365 = vmatprep.subr.mxu0 0.0
    %366 = vmatpush1.msra.mxu0 0.0
    %367 = vmatprep.subr.mxu0 0.0
    %368 = vmatpush1.msra.mxu0 0.0
    %369 = vmatprep.subr.mxu0 0.0
    %370 = vmatpush1.msra.mxu0 0.0
    %371 = vmatprep.subr.mxu0 0.0
    %372 = vmatpush1.msra.mxu0 0.0
    %373 = vmatprep.subr.mxu0 0.0
    %374 = vmatpush1.msra.mxu0 0.0
    %375 = vmatprep.subr.mxu0 0.0
    %376 = vmatpush1.msra.mxu0 0.0
    %377 = vmatprep.mubr.f32.mxu0 0.0
    %378 = vmatmul.mubr.f32.gmra.mrb[0].mxu0 %v241
    %v379 = vpop.f32.mrb[0].mxu0
    %v380 = vadd.f32 0.0, %v379
    %v381 = vpop.f32.mrb[0].mxu0
    %382 = vdwg.mxu0
    %v383 = vmul.f32 %v310, %v310
    %v384 = vmul.f32 %v380, %v380
    %v385 = vadd.f32 %v383, %v384
    %v386 = vadd.f32 %v231, %v385
    %387 = vst [vmem:[#allocation8] sm:$0xff] %v386
    %v388 = vld [vmem:[#allocation8] sm:$0xff]
    %v389 = vld [vmem:[#allocation2 + $0x8] sm:$0xff]
    %390 = vmatprep.subr.mxu0 0.0
    %391 = vmatpush1.msra.mxu0 %v54
    %392 = vmatprep.subr.mxu0 0.0
    %393 = vmatpush1.msra.mxu0 %v55
    %394 = vmatprep.subr.mxu0 0.0
    %395 = vmatpush1.msra.mxu0 %v56
    %396 = vmatprep.subr.mxu0 0.0
    %397 = vmatpush1.msra.mxu0 %v57
    %398 = vmatprep.subr.mxu0 0.0
    %399 = vmatpush1.msra.mxu0 %v58
    %400 = vmatprep.subr.mxu0 0.0
    %401 = vmatpush1.msra.mxu0 %v59
    %402 = vmatprep.subr.mxu0 0.0
    %403 = vmatpush1.msra.mxu0 %v60
    %404 = vmatprep.subr.mxu0 0.0
    %405 = vmatpush1.msra.mxu0 %v61
    %406 = vmatprep.subr.mxu0 0.0
    %407 = vmatpush1.msra.mxu0 %v62
    %408 = vmatprep.subr.mxu0 0.0
    %409 = vmatpush1.msra.mxu0 %v63
    %410 = vmatprep.subr.mxu0 0.0
    %411 = vmatpush1.msra.mxu0 %v64
    %412 = vmatprep.subr.mxu0 0.0
    %413 = vmatpush1.msra.mxu0 %v65
    %414 = vmatprep.subr.mxu0 0.0
    %415 = vmatpush1.msra.mxu0 %v66
    %416 = vmatprep.subr.mxu0 0.0
    %417 = vmatpush1.msra.mxu0 %v67
    %418 = vmatprep.subr.mxu0 0.0
    %419 = vmatpush1.msra.mxu0 %v68
    %420 = vmatprep.subr.mxu0 0.0
    %421 = vmatpush1.msra.mxu0 %v69
    %422 = vmatprep.subr.mxu0 0.0
    %423 = vmatpush1.msra.mxu0 0.0
    %424 = vmatprep.subr.mxu0 0.0
    %425 = vmatpush1.msra.mxu0 0.0
    %426 = vmatprep.subr.mxu0 0.0
    %427 = vmatpush1.msra.mxu0 0.0
    %428 = vmatprep.subr.mxu0 0.0
    %429 = vmatpush1.msra.mxu0 0.0
    %430 = vmatprep.subr.mxu0 0.0
    %431 = vmatpush1.msra.mxu0 0.0
    %432 = vmatprep.subr.mxu0 0.0
    %433 = vmatpush1.msra.mxu0 0.0
    %434 = vmatprep.subr.mxu0 0.0
    %435 = vmatpush1.msra.mxu0 0.0
    %436 = vmatprep.subr.mxu0 0.0
    %437 = vmatpush1.msra.mxu0 0.0
    %438 = vmatprep.subr.mxu0 0.0
    %439 = vmatpush1.msra.mxu0 0.0
    %440 = vmatprep.subr.mxu0 0.0
    %441 = vmatpush1.msra.mxu0 0.0
    %442 = vmatprep.subr.mxu0 0.0
    %443 = vmatpush1.msra.mxu0 0.0
    %444 = vmatprep.subr.mxu0 0.0
    %445 = vmatpush1.msra.mxu0 0.0
    %446 = vmatprep.subr.mxu0 0.0
    %447 = vmatpush1.msra.mxu0 0.0
    %448 = vmatprep.subr.mxu0 0.0
    %449 = vmatpush1.msra.mxu0 0.0
    %450 = vmatprep.subr.mxu0 0.0
    %451 = vmatpush1.msra.mxu0 0.0
    %452 = vmatprep.subr.mxu0 0.0
    %453 = vmatpush1.msra.mxu0 0.0
    %454 = vmatprep.mubr.f32.mxu0 0.0
    %455 = vmatmul.mubr.f32.gmra.mrb[0].mxu0 %v389
    %v456 = vpop.f32.mrb[0].mxu0
    %v457 = vadd.f32 0.0, %v456
    %v458 = vpop.f32.mrb[0].mxu0
    %459 = vdwg.mxu0
    %460 = vmatprep.subr.mxu0 0.0
    %461 = vmatpush1.msra.mxu0 %v70
    %462 = vmatprep.subr.mxu0 0.0
    %463 = vmatpush1.msra.mxu0 %v71
    %464 = vmatprep.subr.mxu0 0.0
    %465 = vmatpush1.msra.mxu0 %v72
    %466 = vmatprep.subr.mxu0 0.0
    %467 = vmatpush1.msra.mxu0 %v73
    %468 = vmatprep.subr.mxu0 0.0
    %469 = vmatpush1.msra.mxu0 %v74
    %470 = vmatprep.subr.mxu0 0.0
    %471 = vmatpush1.msra.mxu0 %v75
    %472 = vmatprep.subr.mxu0 0.0
    %473 = vmatpush1.msra.mxu0 %v76
    %474 = vmatprep.subr.mxu0 0.0
    %475 = vmatpush1.msra.mxu0 %v77
    %476 = vmatprep.subr.mxu0 0.0
    %477 = vmatpush1.msra.mxu0 %v78
    %478 = vmatprep.subr.mxu0 0.0
    %479 = vmatpush1.msra.mxu0 %v79
    %480 = vmatprep.subr.mxu0 0.0
    %481 = vmatpush1.msra.mxu0 %v80
    %482 = vmatprep.subr.mxu0 0.0
    %483 = vmatpush1.msra.mxu0 %v81
    %484 = vmatprep.subr.mxu0 0.0
    %485 = vmatpush1.msra.mxu0 %v82
    %486 = vmatprep.subr.mxu0 0.0
    %487 = vmatpush1.msra.mxu0 %v83
    %488 = vmatprep.subr.mxu0 0.0
    %489 = vmatpush1.msra.mxu0 %v84
    %490 = vmatprep.subr.mxu0 0.0
    %491 = vmatpush1.msra.mxu0 %v85
    %492 = vmatprep.subr.mxu0 0.0
    %493 = vmatpush1.msra.mxu0 0.0
    %494 = vmatprep.subr.mxu0 0.0
    %495 = vmatpush1.msra.mxu0 0.0
    %496 = vmatprep.subr.mxu0 0.0
    %497 = vmatpush1.msra.mxu0 0.0
    %498 = vmatprep.subr.mxu0 0.0
    %499 = vmatpush1.msra.mxu0 0.0
    %500 = vmatprep.subr.mxu0 0.0
    %501 = vmatpush1.msra.mxu0 0.0
    %502 = vmatprep.subr.mxu0 0.0
    %503 = vmatpush1.msra.mxu0 0.0
    %504 = vmatprep.subr.mxu0 0.0
    %505 = vmatpush1.msra.mxu0 0.0
    %506 = vmatprep.subr.mxu0 0.0
    %507 = vmatpush1.msra.mxu0 0.0
    %508 = vmatprep.subr.mxu0 0.0
    %509 = vmatpush1.msra.mxu0 0.0
    %510 = vmatprep.subr.mxu0 0.0
    %511 = vmatpush1.msra.mxu0 0.0
    %512 = vmatprep.subr.mxu0 0.0
    %513 = vmatpush1.msra.mxu0 0.0
    %514 = vmatprep.subr.mxu0 0.0
    %515 = vmatpush1.msra.mxu0 0.0
    %516 = vmatprep.subr.mxu0 0.0
    %517 = vmatpush1.msra.mxu0 0.0
    %518 = vmatprep.subr.mxu0 0.0
    %519 = vmatpush1.msra.mxu0 0.0
    %520 = vmatprep.subr.mxu0 0.0
    %521 = vmatpush1.msra.mxu0 0.0
    %522 = vmatprep.subr.mxu0 0.0
    %523 = vmatpush1.msra.mxu0 0.0
    %524 = vmatprep.mubr.f32.mxu0 0.0
    %525 = vmatmul.mubr.f32.gmra.mrb[0].mxu0 %v389
    %v526 = vpop.f32.mrb[0].mxu0
    %v527 = vadd.f32 0.0, %v526
    %v528 = vpop.f32.mrb[0].mxu0
    %529 = vdwg.mxu0
    %v530 = vmul.f32 %v457, %v457
    %v531 = vmul.f32 %v527, %v527
    %v532 = vadd.f32 %v530, %v531
    %v533 = vadd.f32 %v388, %v532
    %534 = vst [vmem:[#allocation8] sm:$0xff] %v533
    %v535 = vld [vmem:[#allocation8] sm:$0xff]
    %v536 = vld [vmem:[#allocation2 + $0x8] sm:$0xff]
    %v537 = vld [vmem:[#allocation2 + $0x10] sm:$0xff]
    %540 = vrot.lane.b32.xlu0 %v536, 64
    %v541 = vpop.permute.xlu0 %540
    %542 = vrot.lane.b32.xlu0 %v537, 64
    %v543 = vpop.permute.xlu0 %542
    %v544 = vsel %vm240, %v541, %v543
    %546 = vmatprep.subr.mxu0 0.0
    %547 = vmatpush1.msra.mxu0 %v54
    %548 = vmatprep.subr.mxu0 0.0
    %549 = vmatpush1.msra.mxu0 %v55
    %550 = vmatprep.subr.mxu0 0.0
    %551 = vmatpush1.msra.mxu0 %v56
    %552 = vmatprep.subr.mxu0 0.0
    %553 = vmatpush1.msra.mxu0 %v57
    %554 = vmatprep.subr.mxu0 0.0
    %555 = vmatpush1.msra.mxu0 %v58
    %556 = vmatprep.subr.mxu0 0.0
    %557 = vmatpush1.msra.mxu0 %v59
    %558 = vmatprep.subr.mxu0 0.0
    %559 = vmatpush1.msra.mxu0 %v60
    %560 = vmatprep.subr.mxu0 0.0
    %561 = vmatpush1.msra.mxu0 %v61
    %562 = vmatprep.subr.mxu0 0.0
    %563 = vmatpush1.msra.mxu0 %v62
    %564 = vmatprep.subr.mxu0 0.0
    %565 = vmatpush1.msra.mxu0 %v63
    %566 = vmatprep.subr.mxu0 0.0
    %567 = vmatpush1.msra.mxu0 %v64
    %568 = vmatprep.subr.mxu0 0.0
    %569 = vmatpush1.msra.mxu0 %v65
    %570 = vmatprep.subr.mxu0 0.0
    %571 = vmatpush1.msra.mxu0 %v66
    %572 = vmatprep.subr.mxu0 0.0
    %573 = vmatpush1.msra.mxu0 %v67
    %574 = vmatprep.subr.mxu0 0.0
    %575 = vmatpush1.msra.mxu0 %v68
    %576 = vmatprep.subr.mxu0 0.0
    %577 = vmatpush1.msra.mxu0 %v69
    %578 = vmatprep.subr.mxu0 0.0
    %579 = vmatpush1.msra.mxu0 0.0
    %580 = vmatprep.subr.mxu0 0.0
    %581 = vmatpush1.msra.mxu0 0.0
    %582 = vmatprep.subr.mxu0 0.0
    %583 = vmatpush1.msra.mxu0 0.0
    %584 = vmatprep.subr.mxu0 0.0
    %585 = vmatpush1.msra.mxu0 0.0
    %586 = vmatprep.subr.mxu0 0.0
    %587 = vmatpush1.msra.mxu0 0.0
    %588 = vmatprep.subr.mxu0 0.0
    %589 = vmatpush1.msra.mxu0 0.0
    %590 = vmatprep.subr.mxu0 0.0
    %591 = vmatpush1.msra.mxu0 0.0
    %592 = vmatprep.subr.mxu0 0.0
    %593 = vmatpush1.msra.mxu0 0.0
    %594 = vmatprep.subr.mxu0 0.0
    %595 = vmatpush1.msra.mxu0 0.0
    %596 = vmatprep.subr.mxu0 0.0
    %597 = vmatpush1.msra.mxu0 0.0
    %598 = vmatprep.subr.mxu0 0.0
    %599 = vmatpush1.msra.mxu0 0.0
    %600 = vmatprep.subr.mxu0 0.0
    %601 = vmatpush1.msra.mxu0 0.0
    %602 = vmatprep.subr.mxu0 0.0
    %603 = vmatpush1.msra.mxu0 0.0
    %604 = vmatprep.subr.mxu0 0.0
    %605 = vmatpush1.msra.mxu0 0.0
    %606 = vmatprep.subr.mxu0 0.0
    %607 = vmatpush1.msra.mxu0 0.0
    %608 = vmatprep.subr.mxu0 0.0
    %609 = vmatpush1.msra.mxu0 0.0
    %610 = vmatprep.mubr.f32.mxu0 0.0
    %611 = vmatmul.mubr.f32.gmra.mrb[0].mxu0 %v544
    %v612 = vpop.f32.mrb[0].mxu0
    %v613 = vadd.f32 0.0, %v612
    %v614 = vpop.f32.mrb[0].mxu0
    %615 = vdwg.mxu0
    %616 = vmatprep.subr.mxu0 0.0
    %617 = vmatpush1.msra.mxu0 %v70
    %618 = vmatprep.subr.mxu0 0.0
    %619 = vmatpush1.msra.mxu0 %v71
    %620 = vmatprep.subr.mxu0 0.0
    %621 = vmatpush1.msra.mxu0 %v72
    %622 = vmatprep.subr.mxu0 0.0
    %623 = vmatpush1.msra.mxu0 %v73
    %624 = vmatprep.subr.mxu0 0.0
    %625 = vmatpush1.msra.mxu0 %v74
    %626 = vmatprep.subr.mxu0 0.0
    %627 = vmatpush1.msra.mxu0 %v75
    %628 = vmatprep.subr.mxu0 0.0
    %629 = vmatpush1.msra.mxu0 %v76
    %630 = vmatprep.subr.mxu0 0.0
    %631 = vmatpush1.msra.mxu0 %v77
    %632 = vmatprep.subr.mxu0 0.0
    %633 = vmatpush1.msra.mxu0 %v78
    %634 = vmatprep.subr.mxu0 0.0
    %635 = vmatpush1.msra.mxu0 %v79
    %636 = vmatprep.subr.mxu0 0.0
    %637 = vmatpush1.msra.mxu0 %v80
    %638 = vmatprep.subr.mxu0 0.0
    %639 = vmatpush1.msra.mxu0 %v81
    %640 = vmatprep.subr.mxu0 0.0
    %641 = vmatpush1.msra.mxu0 %v82
    %642 = vmatprep.subr.mxu0 0.0
    %643 = vmatpush1.msra.mxu0 %v83
    %644 = vmatprep.subr.mxu0 0.0
    %645 = vmatpush1.msra.mxu0 %v84
    %646 = vmatprep.subr.mxu0 0.0
    %647 = vmatpush1.msra.mxu0 %v85
    %648 = vmatprep.subr.mxu0 0.0
    %649 = vmatpush1.msra.mxu0 0.0
    %650 = vmatprep.subr.mxu0 0.0
    %651 = vmatpush1.msra.mxu0 0.0
    %652 = vmatprep.subr.mxu0 0.0
    %653 = vmatpush1.msra.mxu0 0.0
    %654 = vmatprep.subr.mxu0 0.0
    %655 = vmatpush1.msra.mxu0 0.0
    %656 = vmatprep.subr.mxu0 0.0
    %657 = vmatpush1.msra.mxu0 0.0
    %658 = vmatprep.subr.mxu0 0.0
    %659 = vmatpush1.msra.mxu0 0.0
    %660 = vmatprep.subr.mxu0 0.0
    %661 = vmatpush1.msra.mxu0 0.0
    %662 = vmatprep.subr.mxu0 0.0
    %663 = vmatpush1.msra.mxu0 0.0
    %664 = vmatprep.subr.mxu0 0.0
    %665 = vmatpush1.msra.mxu0 0.0
    %666 = vmatprep.subr.mxu0 0.0
    %667 = vmatpush1.msra.mxu0 0.0
    %668 = vmatprep.subr.mxu0 0.0
    %669 = vmatpush1.msra.mxu0 0.0
    %670 = vmatprep.subr.mxu0 0.0
    %671 = vmatpush1.msra.mxu0 0.0
    %672 = vmatprep.subr.mxu0 0.0
    %673 = vmatpush1.msra.mxu0 0.0
    %674 = vmatprep.subr.mxu0 0.0
    %675 = vmatpush1.msra.mxu0 0.0
    %676 = vmatprep.subr.mxu0 0.0
    %677 = vmatpush1.msra.mxu0 0.0
    %678 = vmatprep.subr.mxu0 0.0
    %679 = vmatpush1.msra.mxu0 0.0
    %680 = vmatprep.mubr.f32.mxu0 0.0
    %681 = vmatmul.mubr.f32.gmra.mrb[0].mxu0 %v544
    %v682 = vpop.f32.mrb[0].mxu0
    %v683 = vadd.f32 0.0, %v682
    %v684 = vpop.f32.mrb[0].mxu0
    %685 = vdwg.mxu0
    %v686 = vmul.f32 %v613, %v613
    %v687 = vmul.f32 %v683, %v683
    %v688 = vadd.f32 %v686, %v687
    %v689 = vadd.f32 %v535, %v688
    %690 = vst [vmem:[#allocation8] sm:$0xff] %v689
    %v691 = vld [vmem:[#allocation8] sm:$0xff]
    %v692 = vld [vmem:[#allocation2 + $0x10] sm:$0xff]
    %693 = vmatprep.subr.mxu0 0.0
    %694 = vmatpush1.msra.mxu0 %v54
    %695 = vmatprep.subr.mxu0 0.0
    %696 = vmatpush1.msra.mxu0 %v55
    %697 = vmatprep.subr.mxu0 0.0
    %698 = vmatpush1.msra.mxu0 %v56
    %699 = vmatprep.subr.mxu0 0.0
    %700 = vmatpush1.msra.mxu0 %v57
    %701 = vmatprep.subr.mxu0 0.0
    %702 = vmatpush1.msra.mxu0 %v58
    %703 = vmatprep.subr.mxu0 0.0
    %704 = vmatpush1.msra.mxu0 %v59
    %705 = vmatprep.subr.mxu0 0.0
    %706 = vmatpush1.msra.mxu0 %v60
    %707 = vmatprep.subr.mxu0 0.0
    %708 = vmatpush1.msra.mxu0 %v61
    %709 = vmatprep.subr.mxu0 0.0
    %710 = vmatpush1.msra.mxu0 %v62
    %711 = vmatprep.subr.mxu0 0.0
    %712 = vmatpush1.msra.mxu0 %v63
    %713 = vmatprep.subr.mxu0 0.0
    %714 = vmatpush1.msra.mxu0 %v64
    %715 = vmatprep.subr.mxu0 0.0
    %716 = vmatpush1.msra.mxu0 %v65
    %717 = vmatprep.subr.mxu0 0.0
    %718 = vmatpush1.msra.mxu0 %v66
    %719 = vmatprep.subr.mxu0 0.0
    %720 = vmatpush1.msra.mxu0 %v67
    %721 = vmatprep.subr.mxu0 0.0
    %722 = vmatpush1.msra.mxu0 %v68
    %723 = vmatprep.subr.mxu0 0.0
    %724 = vmatpush1.msra.mxu0 %v69
    %725 = vmatprep.subr.mxu0 0.0
    %726 = vmatpush1.msra.mxu0 0.0
    %727 = vmatprep.subr.mxu0 0.0
    %728 = vmatpush1.msra.mxu0 0.0
    %729 = vmatprep.subr.mxu0 0.0
    %730 = vmatpush1.msra.mxu0 0.0
    %731 = vmatprep.subr.mxu0 0.0
    %732 = vmatpush1.msra.mxu0 0.0
    %733 = vmatprep.subr.mxu0 0.0
    %734 = vmatpush1.msra.mxu0 0.0
    %735 = vmatprep.subr.mxu0 0.0
    %736 = vmatpush1.msra.mxu0 0.0
    %737 = vmatprep.subr.mxu0 0.0
    %738 = vmatpush1.msra.mxu0 0.0
    %739 = vmatprep.subr.mxu0 0.0
    %740 = vmatpush1.msra.mxu0 0.0
    %741 = vmatprep.subr.mxu0 0.0
    %742 = vmatpush1.msra.mxu0 0.0
    %743 = vmatprep.subr.mxu0 0.0
    %744 = vmatpush1.msra.mxu0 0.0
    %745 = vmatprep.subr.mxu0 0.0
    %746 = vmatpush1.msra.mxu0 0.0
    %747 = vmatprep.subr.mxu0 0.0
    %748 = vmatpush1.msra.mxu0 0.0
    %749 = vmatprep.subr.mxu0 0.0
    %750 = vmatpush1.msra.mxu0 0.0
    %751 = vmatprep.subr.mxu0 0.0
    %752 = vmatpush1.msra.mxu0 0.0
    %753 = vmatprep.subr.mxu0 0.0
    %754 = vmatpush1.msra.mxu0 0.0
    %755 = vmatprep.subr.mxu0 0.0
    %756 = vmatpush1.msra.mxu0 0.0
    %757 = vmatprep.mubr.f32.mxu0 0.0
    %758 = vmatmul.mubr.f32.gmra.mrb[0].mxu0 %v692
    %v759 = vpop.f32.mrb[0].mxu0
    %v760 = vadd.f32 0.0, %v759
    %v761 = vpop.f32.mrb[0].mxu0
    %762 = vdwg.mxu0
    %763 = vmatprep.subr.mxu0 0.0
    %764 = vmatpush1.msra.mxu0 %v70
    %765 = vmatprep.subr.mxu0 0.0
    %766 = vmatpush1.msra.mxu0 %v71
    %767 = vmatprep.subr.mxu0 0.0
    %768 = vmatpush1.msra.mxu0 %v72
    %769 = vmatprep.subr.mxu0 0.0
    %770 = vmatpush1.msra.mxu0 %v73
    %771 = vmatprep.subr.mxu0 0.0
    %772 = vmatpush1.msra.mxu0 %v74
    %773 = vmatprep.subr.mxu0 0.0
    %774 = vmatpush1.msra.mxu0 %v75
    %775 = vmatprep.subr.mxu0 0.0
    %776 = vmatpush1.msra.mxu0 %v76
    %777 = vmatprep.subr.mxu0 0.0
    %778 = vmatpush1.msra.mxu0 %v77
    %779 = vmatprep.subr.mxu0 0.0
    %780 = vmatpush1.msra.mxu0 %v78
    %781 = vmatprep.subr.mxu0 0.0
    %782 = vmatpush1.msra.mxu0 %v79
    %783 = vmatprep.subr.mxu0 0.0
    %784 = vmatpush1.msra.mxu0 %v80
    %785 = vmatprep.subr.mxu0 0.0
    %786 = vmatpush1.msra.mxu0 %v81
    %787 = vmatprep.subr.mxu0 0.0
    %788 = vmatpush1.msra.mxu0 %v82
    %789 = vmatprep.subr.mxu0 0.0
    %790 = vmatpush1.msra.mxu0 %v83
    %791 = vmatprep.subr.mxu0 0.0
    %792 = vmatpush1.msra.mxu0 %v84
    %793 = vmatprep.subr.mxu0 0.0
    %794 = vmatpush1.msra.mxu0 %v85
    %795 = vmatprep.subr.mxu0 0.0
    %796 = vmatpush1.msra.mxu0 0.0
    %797 = vmatprep.subr.mxu0 0.0
    %798 = vmatpush1.msra.mxu0 0.0
    %799 = vmatprep.subr.mxu0 0.0
    %800 = vmatpush1.msra.mxu0 0.0
    %801 = vmatprep.subr.mxu0 0.0
    %802 = vmatpush1.msra.mxu0 0.0
    %803 = vmatprep.subr.mxu0 0.0
    %804 = vmatpush1.msra.mxu0 0.0
    %805 = vmatprep.subr.mxu0 0.0
    %806 = vmatpush1.msra.mxu0 0.0
    %807 = vmatprep.subr.mxu0 0.0
    %808 = vmatpush1.msra.mxu0 0.0
    %809 = vmatprep.subr.mxu0 0.0
    %810 = vmatpush1.msra.mxu0 0.0
    %811 = vmatprep.subr.mxu0 0.0
    %812 = vmatpush1.msra.mxu0 0.0
    %813 = vmatprep.subr.mxu0 0.0
    %814 = vmatpush1.msra.mxu0 0.0
    %815 = vmatprep.subr.mxu0 0.0
    %816 = vmatpush1.msra.mxu0 0.0
    %817 = vmatprep.subr.mxu0 0.0
    %818 = vmatpush1.msra.mxu0 0.0
    %819 = vmatprep.subr.mxu0 0.0
    %820 = vmatpush1.msra.mxu0 0.0
    %821 = vmatprep.subr.mxu0 0.0
    %822 = vmatpush1.msra.mxu0 0.0
    %823 = vmatprep.subr.mxu0 0.0
    %824 = vmatpush1.msra.mxu0 0.0
    %825 = vmatprep.subr.mxu0 0.0
    %826 = vmatpush1.msra.mxu0 0.0
    %827 = vmatprep.mubr.f32.mxu0 0.0
    %828 = vmatmul.mubr.f32.gmra.mrb[0].mxu0 %v692
    %v829 = vpop.f32.mrb[0].mxu0
    %v830 = vadd.f32 0.0, %v829
    %v831 = vpop.f32.mrb[0].mxu0
    %832 = vdwg.mxu0
    %v833 = vmul.f32 %v760, %v760
    %v834 = vmul.f32 %v830, %v830
    %v835 = vadd.f32 %v833, %v834
    %v836 = vadd.f32 %v691, %v835
    %837 = vst [vmem:[#allocation8] sm:$0xff] %v836
    %v838 = vld [vmem:[#allocation8] sm:$0xff]
    %v839 = vld [vmem:[#allocation2 + $0x10] sm:$0xff]
    %v840 = vld [vmem:[#allocation2 + $0x18] sm:$0xff]
    %843 = vrot.lane.b32.xlu0 %v839, 64
    %v844 = vpop.permute.xlu0 %843
    %845 = vrot.lane.b32.xlu0 %v840, 64
    %v846 = vpop.permute.xlu0 %845
    %v847 = vsel %vm240, %v844, %v846
    %849 = vmatprep.subr.mxu0 0.0
    %850 = vmatpush1.msra.mxu0 %v54
    %851 = vmatprep.subr.mxu0 0.0
    %852 = vmatpush1.msra.mxu0 %v55
    %853 = vmatprep.subr.mxu0 0.0
    %854 = vmatpush1.msra.mxu0 %v56
    %855 = vmatprep.subr.mxu0 0.0
    %856 = vmatpush1.msra.mxu0 %v57
    %857 = vmatprep.subr.mxu0 0.0
    %858 = vmatpush1.msra.mxu0 %v58
    %859 = vmatprep.subr.mxu0 0.0
    %860 = vmatpush1.msra.mxu0 %v59
    %861 = vmatprep.subr.mxu0 0.0
    %862 = vmatpush1.msra.mxu0 %v60
    %863 = vmatprep.subr.mxu0 0.0
    %864 = vmatpush1.msra.mxu0 %v61
    %865 = vmatprep.subr.mxu0 0.0
    %866 = vmatpush1.msra.mxu0 %v62
    %867 = vmatprep.subr.mxu0 0.0
    %868 = vmatpush1.msra.mxu0 %v63
    %869 = vmatprep.subr.mxu0 0.0
    %870 = vmatpush1.msra.mxu0 %v64
    %871 = vmatprep.subr.mxu0 0.0
    %872 = vmatpush1.msra.mxu0 %v65
    %873 = vmatprep.subr.mxu0 0.0
    %874 = vmatpush1.msra.mxu0 %v66
    %875 = vmatprep.subr.mxu0 0.0
    %876 = vmatpush1.msra.mxu0 %v67
    %877 = vmatprep.subr.mxu0 0.0
    %878 = vmatpush1.msra.mxu0 %v68
    %879 = vmatprep.subr.mxu0 0.0
    %880 = vmatpush1.msra.mxu0 %v69
    %881 = vmatprep.subr.mxu0 0.0
    %882 = vmatpush1.msra.mxu0 0.0
    %883 = vmatprep.subr.mxu0 0.0
    %884 = vmatpush1.msra.mxu0 0.0
    %885 = vmatprep.subr.mxu0 0.0
    %886 = vmatpush1.msra.mxu0 0.0
    %887 = vmatprep.subr.mxu0 0.0
    %888 = vmatpush1.msra.mxu0 0.0
    %889 = vmatprep.subr.mxu0 0.0
    %890 = vmatpush1.msra.mxu0 0.0
    %891 = vmatprep.subr.mxu0 0.0
    %892 = vmatpush1.msra.mxu0 0.0
    %893 = vmatprep.subr.mxu0 0.0
    %894 = vmatpush1.msra.mxu0 0.0
    %895 = vmatprep.subr.mxu0 0.0
    %896 = vmatpush1.msra.mxu0 0.0
    %897 = vmatprep.subr.mxu0 0.0
    %898 = vmatpush1.msra.mxu0 0.0
    %899 = vmatprep.subr.mxu0 0.0
    %900 = vmatpush1.msra.mxu0 0.0
    %901 = vmatprep.subr.mxu0 0.0
    %902 = vmatpush1.msra.mxu0 0.0
    %903 = vmatprep.subr.mxu0 0.0
    %904 = vmatpush1.msra.mxu0 0.0
    %905 = vmatprep.subr.mxu0 0.0
    %906 = vmatpush1.msra.mxu0 0.0
    %907 = vmatprep.subr.mxu0 0.0
    %908 = vmatpush1.msra.mxu0 0.0
    %909 = vmatprep.subr.mxu0 0.0
    %910 = vmatpush1.msra.mxu0 0.0
    %911 = vmatprep.subr.mxu0 0.0
    %912 = vmatpush1.msra.mxu0 0.0
    %913 = vmatprep.mubr.f32.mxu0 0.0
    %914 = vmatmul.mubr.f32.gmra.mrb[0].mxu0 %v847
    %v915 = vpop.f32.mrb[0].mxu0
    %v916 = vadd.f32 0.0, %v915
    %v917 = vpop.f32.mrb[0].mxu0
    %918 = vdwg.mxu0
    %919 = vmatprep.subr.mxu0 0.0
    %920 = vmatpush1.msra.mxu0 %v70
    %921 = vmatprep.subr.mxu0 0.0
    %922 = vmatpush1.msra.mxu0 %v71
    %923 = vmatprep.subr.mxu0 0.0
    %924 = vmatpush1.msra.mxu0 %v72
    %925 = vmatprep.subr.mxu0 0.0
    %926 = vmatpush1.msra.mxu0 %v73
    %927 = vmatprep.subr.mxu0 0.0
    %928 = vmatpush1.msra.mxu0 %v74
    %929 = vmatprep.subr.mxu0 0.0
    %930 = vmatpush1.msra.mxu0 %v75
    %931 = vmatprep.subr.mxu0 0.0
    %932 = vmatpush1.msra.mxu0 %v76
    %933 = vmatprep.subr.mxu0 0.0
    %934 = vmatpush1.msra.mxu0 %v77
    %935 = vmatprep.subr.mxu0 0.0
    %936 = vmatpush1.msra.mxu0 %v78
    %937 = vmatprep.subr.mxu0 0.0
    %938 = vmatpush1.msra.mxu0 %v79
    %939 = vmatprep.subr.mxu0 0.0
    %940 = vmatpush1.msra.mxu0 %v80
    %941 = vmatprep.subr.mxu0 0.0
    %942 = vmatpush1.msra.mxu0 %v81
    %943 = vmatprep.subr.mxu0 0.0
    %944 = vmatpush1.msra.mxu0 %v82
    %945 = vmatprep.subr.mxu0 0.0
    %946 = vmatpush1.msra.mxu0 %v83
    %947 = vmatprep.subr.mxu0 0.0
    %948 = vmatpush1.msra.mxu0 %v84
    %949 = vmatprep.subr.mxu0 0.0
    %950 = vmatpush1.msra.mxu0 %v85
    %951 = vmatprep.subr.mxu0 0.0
    %952 = vmatpush1.msra.mxu0 0.0
    %953 = vmatprep.subr.mxu0 0.0
    %954 = vmatpush1.msra.mxu0 0.0
    %955 = vmatprep.subr.mxu0 0.0
    %956 = vmatpush1.msra.mxu0 0.0
    %957 = vmatprep.subr.mxu0 0.0
    %958 = vmatpush1.msra.mxu0 0.0
    %959 = vmatprep.subr.mxu0 0.0
    %960 = vmatpush1.msra.mxu0 0.0
    %961 = vmatprep.subr.mxu0 0.0
    %962 = vmatpush1.msra.mxu0 0.0
    %963 = vmatprep.subr.mxu0 0.0
    %964 = vmatpush1.msra.mxu0 0.0
    %965 = vmatprep.subr.mxu0 0.0
    %966 = vmatpush1.msra.mxu0 0.0
    %967 = vmatprep.subr.mxu0 0.0
    %968 = vmatpush1.msra.mxu0 0.0
    %969 = vmatprep.subr.mxu0 0.0
    %970 = vmatpush1.msra.mxu0 0.0
    %971 = vmatprep.subr.mxu0 0.0
    %972 = vmatpush1.msra.mxu0 0.0
    %973 = vmatprep.subr.mxu0 0.0
    %974 = vmatpush1.msra.mxu0 0.0
    %975 = vmatprep.subr.mxu0 0.0
    %976 = vmatpush1.msra.mxu0 0.0
    %977 = vmatprep.subr.mxu0 0.0
    %978 = vmatpush1.msra.mxu0 0.0
    %979 = vmatprep.subr.mxu0 0.0
    %980 = vmatpush1.msra.mxu0 0.0
    %981 = vmatprep.subr.mxu0 0.0
    %982 = vmatpush1.msra.mxu0 0.0
    %983 = vmatprep.mubr.f32.mxu0 0.0
    %984 = vmatmul.mubr.f32.gmra.mrb[0].mxu0 %v847
    %v985 = vpop.f32.mrb[0].mxu0
    %v986 = vadd.f32 0.0, %v985
    %v987 = vpop.f32.mrb[0].mxu0
    %988 = vdwg.mxu0
    %v989 = vmul.f32 %v916, %v916
    %v990 = vmul.f32 %v986, %v986
    %v991 = vadd.f32 %v989, %v990
    %v992 = vadd.f32 %v838, %v991
    %993 = vst [vmem:[#allocation8] sm:$0xff] %v992
    %v994 = vld [vmem:[#allocation8] sm:$0xff]
    %v995 = vld [vmem:[#allocation2 + $0x18] sm:$0xff]
    %996 = vmatprep.subr.mxu0 0.0
    %997 = vmatpush1.msra.mxu0 %v54
    %998 = vmatprep.subr.mxu0 0.0
    %999 = vmatpush1.msra.mxu0 %v55
    %1000 = vmatprep.subr.mxu0 0.0
    %1001 = vmatpush1.msra.mxu0 %v56
    %1002 = vmatprep.subr.mxu0 0.0
    %1003 = vmatpush1.msra.mxu0 %v57
    %1004 = vmatprep.subr.mxu0 0.0
    %1005 = vmatpush1.msra.mxu0 %v58
    %1006 = vmatprep.subr.mxu0 0.0
    %1007 = vmatpush1.msra.mxu0 %v59
    %1008 = vmatprep.subr.mxu0 0.0
    %1009 = vmatpush1.msra.mxu0 %v60
    %1010 = vmatprep.subr.mxu0 0.0
    %1011 = vmatpush1.msra.mxu0 %v61
    %1012 = vmatprep.subr.mxu0 0.0
    %1013 = vmatpush1.msra.mxu0 %v62
    %1014 = vmatprep.subr.mxu0 0.0
    %1015 = vmatpush1.msra.mxu0 %v63
    %1016 = vmatprep.subr.mxu0 0.0
    %1017 = vmatpush1.msra.mxu0 %v64
    %1018 = vmatprep.subr.mxu0 0.0
    %1019 = vmatpush1.msra.mxu0 %v65
    %1020 = vmatprep.subr.mxu0 0.0
    %1021 = vmatpush1.msra.mxu0 %v66
    %1022 = vmatprep.subr.mxu0 0.0
    %1023 = vmatpush1.msra.mxu0 %v67
    %1024 = vmatprep.subr.mxu0 0.0
    %1025 = vmatpush1.msra.mxu0 %v68
    %1026 = vmatprep.subr.mxu0 0.0
    %1027 = vmatpush1.msra.mxu0 %v69
    %1028 = vmatprep.subr.mxu0 0.0
    %1029 = vmatpush1.msra.mxu0 0.0
    %1030 = vmatprep.subr.mxu0 0.0
    %1031 = vmatpush1.msra.mxu0 0.0
    %1032 = vmatprep.subr.mxu0 0.0
    %1033 = vmatpush1.msra.mxu0 0.0
    %1034 = vmatprep.subr.mxu0 0.0
    %1035 = vmatpush1.msra.mxu0 0.0
    %1036 = vmatprep.subr.mxu0 0.0
    %1037 = vmatpush1.msra.mxu0 0.0
    %1038 = vmatprep.subr.mxu0 0.0
    %1039 = vmatpush1.msra.mxu0 0.0
    %1040 = vmatprep.subr.mxu0 0.0
    %1041 = vmatpush1.msra.mxu0 0.0
    %1042 = vmatprep.subr.mxu0 0.0
    %1043 = vmatpush1.msra.mxu0 0.0
    %1044 = vmatprep.subr.mxu0 0.0
    %1045 = vmatpush1.msra.mxu0 0.0
    %1046 = vmatprep.subr.mxu0 0.0
    %1047 = vmatpush1.msra.mxu0 0.0
    %1048 = vmatprep.subr.mxu0 0.0
    %1049 = vmatpush1.msra.mxu0 0.0
    %1050 = vmatprep.subr.mxu0 0.0
    %1051 = vmatpush1.msra.mxu0 0.0
    %1052 = vmatprep.subr.mxu0 0.0
    %1053 = vmatpush1.msra.mxu0 0.0
    %1054 = vmatprep.subr.mxu0 0.0
    %1055 = vmatpush1.msra.mxu0 0.0
    %1056 = vmatprep.subr.mxu0 0.0
    %1057 = vmatpush1.msra.mxu0 0.0
    %1058 = vmatprep.subr.mxu0 0.0
    %1059 = vmatpush1.msra.mxu0 0.0
    %1060 = vmatprep.mubr.f32.mxu0 0.0
    %1061 = vmatmul.mubr.f32.gmra.mrb[0].mxu0 %v995
    %v1062 = vpop.f32.mrb[0].mxu0
    %v1063 = vadd.f32 0.0, %v1062
    %v1064 = vpop.f32.mrb[0].mxu0
    %1065 = vdwg.mxu0
    %1066 = vmatprep.subr.mxu0 0.0
    %1067 = vmatpush1.msra.mxu0 %v70
    %1068 = vmatprep.subr.mxu0 0.0
    %1069 = vmatpush1.msra.mxu0 %v71
    %1070 = vmatprep.subr.mxu0 0.0
    %1071 = vmatpush1.msra.mxu0 %v72
    %1072 = vmatprep.subr.mxu0 0.0
    %1073 = vmatpush1.msra.mxu0 %v73
    %1074 = vmatprep.subr.mxu0 0.0
    %1075 = vmatpush1.msra.mxu0 %v74
    %1076 = vmatprep.subr.mxu0 0.0
    %1077 = vmatpush1.msra.mxu0 %v75
    %1078 = vmatprep.subr.mxu0 0.0
    %1079 = vmatpush1.msra.mxu0 %v76
    %1080 = vmatprep.subr.mxu0 0.0
    %1081 = vmatpush1.msra.mxu0 %v77
    %1082 = vmatprep.subr.mxu0 0.0
    %1083 = vmatpush1.msra.mxu0 %v78
    %1084 = vmatprep.subr.mxu0 0.0
    %1085 = vmatpush1.msra.mxu0 %v79
    %1086 = vmatprep.subr.mxu0 0.0
    %1087 = vmatpush1.msra.mxu0 %v80
    %1088 = vmatprep.subr.mxu0 0.0
    %1089 = vmatpush1.msra.mxu0 %v81
    %1090 = vmatprep.subr.mxu0 0.0
    %1091 = vmatpush1.msra.mxu0 %v82
    %1092 = vmatprep.subr.mxu0 0.0
    %1093 = vmatpush1.msra.mxu0 %v83
    %1094 = vmatprep.subr.mxu0 0.0
    %1095 = vmatpush1.msra.mxu0 %v84
    %1096 = vmatprep.subr.mxu0 0.0
    %1097 = vmatpush1.msra.mxu0 %v85
    %1098 = vmatprep.subr.mxu0 0.0
    %1099 = vmatpush1.msra.mxu0 0.0
    %1100 = vmatprep.subr.mxu0 0.0
    %1101 = vmatpush1.msra.mxu0 0.0
    %1102 = vmatprep.subr.mxu0 0.0
    %1103 = vmatpush1.msra.mxu0 0.0
    %1104 = vmatprep.subr.mxu0 0.0
    %1105 = vmatpush1.msra.mxu0 0.0
    %1106 = vmatprep.subr.mxu0 0.0
    %1107 = vmatpush1.msra.mxu0 0.0
    %1108 = vmatprep.subr.mxu0 0.0
    %1109 = vmatpush1.msra.mxu0 0.0
    %1110 = vmatprep.subr.mxu0 0.0
    %1111 = vmatpush1.msra.mxu0 0.0
    %1112 = vmatprep.subr.mxu0 0.0
    %1113 = vmatpush1.msra.mxu0 0.0
    %1114 = vmatprep.subr.mxu0 0.0
    %1115 = vmatpush1.msra.mxu0 0.0
    %1116 = vmatprep.subr.mxu0 0.0
    %1117 = vmatpush1.msra.mxu0 0.0
    %1118 = vmatprep.subr.mxu0 0.0
    %1119 = vmatpush1.msra.mxu0 0.0
    %1120 = vmatprep.subr.mxu0 0.0
    %1121 = vmatpush1.msra.mxu0 0.0
    %1122 = vmatprep.subr.mxu0 0.0
    %1123 = vmatpush1.msra.mxu0 0.0
    %1124 = vmatprep.subr.mxu0 0.0
    %1125 = vmatpush1.msra.mxu0 0.0
    %1126 = vmatprep.subr.mxu0 0.0
    %1127 = vmatpush1.msra.mxu0 0.0
    %1128 = vmatprep.subr.mxu0 0.0
    %1129 = vmatpush1.msra.mxu0 0.0
    %1130 = vmatprep.mubr.f32.mxu0 0.0
    %1131 = vmatmul.mubr.f32.gmra.mrb[0].mxu0 %v995
    %v1132 = vpop.f32.mrb[0].mxu0
    %v1133 = vadd.f32 0.0, %v1132
    %v1134 = vpop.f32.mrb[0].mxu0
    %1135 = vdwg.mxu0
    %v1136 = vmul.f32 %v1063, %v1063
    %v1137 = vmul.f32 %v1133, %v1133
    %v1138 = vadd.f32 %v1136, %v1137
    %v1139 = vadd.f32 %v994, %v1138
    %1140 = vst [vmem:[#allocation8] sm:$0xff] %v1139
    %v1141 = vld [vmem:[#allocation8] sm:$0xff]
    %v1142 = vld [vmem:[#allocation2 + $0x18] sm:$0xff]
    %v1143 = vld [vmem:[#allocation2 + $0x20] sm:$0xff]
    %1146 = vrot.lane.b32.xlu0 %v1142, 64
    %v1147 = vpop.permute.xlu0 %1146
    %1148 = vrot.lane.b32.xlu0 %v1143, 64
    %v1149 = vpop.permute.xlu0 %1148
    %v1150 = vsel %vm240, %v1147, %v1149
    %1152 = vmatprep.subr.mxu0 0.0
    %1153 = vmatpush1.msra.mxu0 %v54
    %1154 = vmatprep.subr.mxu0 0.0
    %1155 = vmatpush1.msra.mxu0 %v55
    %1156 = vmatprep.subr.mxu0 0.0
    %1157 = vmatpush1.msra.mxu0 %v56
    %1158 = vmatprep.subr.mxu0 0.0
    %1159 = vmatpush1.msra.mxu0 %v57
    %1160 = vmatprep.subr.mxu0 0.0
    %1161 = vmatpush1.msra.mxu0 %v58
    %1162 = vmatprep.subr.mxu0 0.0
    %1163 = vmatpush1.msra.mxu0 %v59
    %1164 = vmatprep.subr.mxu0 0.0
    %1165 = vmatpush1.msra.mxu0 %v60
    %1166 = vmatprep.subr.mxu0 0.0
    %1167 = vmatpush1.msra.mxu0 %v61
    %1168 = vmatprep.subr.mxu0 0.0
    %1169 = vmatpush1.msra.mxu0 %v62
    %1170 = vmatprep.subr.mxu0 0.0
    %1171 = vmatpush1.msra.mxu0 %v63
    %1172 = vmatprep.subr.mxu0 0.0
    %1173 = vmatpush1.msra.mxu0 %v64
    %1174 = vmatprep.subr.mxu0 0.0
    %1175 = vmatpush1.msra.mxu0 %v65
    %1176 = vmatprep.subr.mxu0 0.0
    %1177 = vmatpush1.msra.mxu0 %v66
    %1178 = vmatprep.subr.mxu0 0.0
    %1179 = vmatpush1.msra.mxu0 %v67
    %1180 = vmatprep.subr.mxu0 0.0
    %1181 = vmatpush1.msra.mxu0 %v68
    %1182 = vmatprep.subr.mxu0 0.0
    %1183 = vmatpush1.msra.mxu0 %v69
    %1184 = vmatprep.subr.mxu0 0.0
    %1185 = vmatpush1.msra.mxu0 0.0
    %1186 = vmatprep.subr.mxu0 0.0
    %1187 = vmatpush1.msra.mxu0 0.0
    %1188 = vmatprep.subr.mxu0 0.0
    %1189 = vmatpush1.msra.mxu0 0.0
    %1190 = vmatprep.subr.mxu0 0.0
    %1191 = vmatpush1.msra.mxu0 0.0
    %1192 = vmatprep.subr.mxu0 0.0
    %1193 = vmatpush1.msra.mxu0 0.0
    %1194 = vmatprep.subr.mxu0 0.0
    %1195 = vmatpush1.msra.mxu0 0.0
    %1196 = vmatprep.subr.mxu0 0.0
    %1197 = vmatpush1.msra.mxu0 0.0
    %1198 = vmatprep.subr.mxu0 0.0
    %1199 = vmatpush1.msra.mxu0 0.0
    %1200 = vmatprep.subr.mxu0 0.0
    %1201 = vmatpush1.msra.mxu0 0.0
    %1202 = vmatprep.subr.mxu0 0.0
    %1203 = vmatpush1.msra.mxu0 0.0
    %1204 = vmatprep.subr.mxu0 0.0
    %1205 = vmatpush1.msra.mxu0 0.0
    %1206 = vmatprep.subr.mxu0 0.0
    %1207 = vmatpush1.msra.mxu0 0.0
    %1208 = vmatprep.subr.mxu0 0.0
    %1209 = vmatpush1.msra.mxu0 0.0
    %1210 = vmatprep.subr.mxu0 0.0
    %1211 = vmatpush1.msra.mxu0 0.0
    %1212 = vmatprep.subr.mxu0 0.0
    %1213 = vmatpush1.msra.mxu0 0.0
    %1214 = vmatprep.subr.mxu0 0.0
    %1215 = vmatpush1.msra.mxu0 0.0
    %1216 = vmatprep.mubr.f32.mxu0 0.0
    %1217 = vmatmul.mubr.f32.gmra.mrb[0].mxu0 %v1150
    %v1218 = vpop.f32.mrb[0].mxu0
    %v1219 = vadd.f32 0.0, %v1218
    %v1220 = vpop.f32.mrb[0].mxu0
    %1221 = vdwg.mxu0
    %1222 = vmatprep.subr.mxu0 0.0
    %1223 = vmatpush1.msra.mxu0 %v70
    %1224 = vmatprep.subr.mxu0 0.0
    %1225 = vmatpush1.msra.mxu0 %v71
    %1226 = vmatprep.subr.mxu0 0.0
    %1227 = vmatpush1.msra.mxu0 %v72
    %1228 = vmatprep.subr.mxu0 0.0
    %1229 = vmatpush1.msra.mxu0 %v73
    %1230 = vmatprep.subr.mxu0 0.0
    %1231 = vmatpush1.msra.mxu0 %v74
    %1232 = vmatprep.subr.mxu0 0.0
    %1233 = vmatpush1.msra.mxu0 %v75
    %1234 = vmatprep.subr.mxu0 0.0
    %1235 = vmatpush1.msra.mxu0 %v76
    %1236 = vmatprep.subr.mxu0 0.0
    %1237 = vmatpush1.msra.mxu0 %v77
    %1238 = vmatprep.subr.mxu0 0.0
    %1239 = vmatpush1.msra.mxu0 %v78
    %1240 = vmatprep.subr.mxu0 0.0
    %1241 = vmatpush1.msra.mxu0 %v79
    %1242 = vmatprep.subr.mxu0 0.0
    %1243 = vmatpush1.msra.mxu0 %v80
    %1244 = vmatprep.subr.mxu0 0.0
    %1245 = vmatpush1.msra.mxu0 %v81
    %1246 = vmatprep.subr.mxu0 0.0
    %1247 = vmatpush1.msra.mxu0 %v82
    %1248 = vmatprep.subr.mxu0 0.0
    %1249 = vmatpush1.msra.mxu0 %v83
    %1250 = vmatprep.subr.mxu0 0.0
    %1251 = vmatpush1.msra.mxu0 %v84
    %1252 = vmatprep.subr.mxu0 0.0
    %1253 = vmatpush1.msra.mxu0 %v85
    %1254 = vmatprep.subr.mxu0 0.0
    %1255 = vmatpush1.msra.mxu0 0.0
    %1256 = vmatprep.subr.mxu0 0.0
    %1257 = vmatpush1.msra.mxu0 0.0
    %1258 = vmatprep.subr.mxu0 0.0
    %1259 = vmatpush1.msra.mxu0 0.0
    %1260 = vmatprep.subr.mxu0 0.0
    %1261 = vmatpush1.msra.mxu0 0.0
    %1262 = vmatprep.subr.mxu0 0.0
    %1263 = vmatpush1.msra.mxu0 0.0
    %1264 = vmatprep.subr.mxu0 0.0
    %1265 = vmatpush1.msra.mxu0 0.0
    %1266 = vmatprep.subr.mxu0 0.0
    %1267 = vmatpush1.msra.mxu0 0.0
    %1268 = vmatprep.subr.mxu0 0.0
    %1269 = vmatpush1.msra.mxu0 0.0
    %1270 = vmatprep.subr.mxu0 0.0
    %1271 = vmatpush1.msra.mxu0 0.0
    %1272 = vmatprep.subr.mxu0 0.0
    %1273 = vmatpush1.msra.mxu0 0.0
    %1274 = vmatprep.subr.mxu0 0.0
    %1275 = vmatpush1.msra.mxu0 0.0
    %1276 = vmatprep.subr.mxu0 0.0
    %1277 = vmatpush1.msra.mxu0 0.0
    %1278 = vmatprep.subr.mxu0 0.0
    %1279 = vmatpush1.msra.mxu0 0.0
    %1280 = vmatprep.subr.mxu0 0.0
    %1281 = vmatpush1.msra.mxu0 0.0
    %1282 = vmatprep.subr.mxu0 0.0
    %1283 = vmatpush1.msra.mxu0 0.0
    %1284 = vmatprep.subr.mxu0 0.0
    %1285 = vmatpush1.msra.mxu0 0.0
    %1286 = vmatprep.mubr.f32.mxu0 0.0
    %1287 = vmatmul.mubr.f32.gmra.mrb[0].mxu0 %v1150
    %v1288 = vpop.f32.mrb[0].mxu0
    %v1289 = vadd.f32 0.0, %v1288
    %v1290 = vpop.f32.mrb[0].mxu0
    %1291 = vdwg.mxu0
    %v1292 = vmul.f32 %v1219, %v1219
    %v1293 = vmul.f32 %v1289, %v1289
    %v1294 = vadd.f32 %v1292, %v1293
    %v1295 = vadd.f32 %v1141, %v1294
    %1296 = vst [vmem:[#allocation8] sm:$0xff] %v1295
    // Predicated region
    $region26: #{tpu_custom_call.1} parent=1 // pred_check
      _
    $region27: #{tpu_custom_call.1} parent=1 // pred_check_branch
      %1298 = sbr.rel (0) target = $region29
    $region28: #{tpu_custom_call.1} parent=1 // pred_region
      %s1300 = ssub.s32 128, 128
      %1301 = vsyncadd [#allocation4], %s1300
      %s1303 = sshll.u32 [#allocation8], 4
      %s1304 = int_to_ptr.vmem [resolvable:$true] %s1303
      %1306 = dma.vmem_to_hbm [thread:$0]  %s1304, 128, %s3, [#allocation4]
    $region29: #{tpu_custom_call.1} parent=1 // pred_fallthru
      _
    // Predicated region
    $region30: #{tpu_custom_call.1} parent=1 // pred_check
      _
    $region31: #{tpu_custom_call.1} parent=1 // pred_check_branch
      %1308 = sbr.rel (0) target = $region33
    $region32: #{tpu_custom_call.1} parent=1 // pred_region
      %1309 = dma.done [#allocation4], 128
    $region33: #{tpu_custom_call.1} parent=1 // pred_fallthru
      _
    %1310 = vsyncpa [#allocation3], 1
    %1311 = vsyncpa [#allocation6], 1
    %1312 = vsyncpa [#allocation4], 1

</llo_original>
